<compile_context>
chip_gen: v6e
topology: v6e:2x2x1
jax: 0.10.0
libtpu: 0.0.40
codegen_flags: <defaults>
</compile_context>

<pallas_src>
import functools

import numpy as np
import jax
import jax.numpy as jnp
from jax.experimental import pallas as pl
from jax.experimental.pallas import tpu as pltpu


def transition_kernel(x_ref, scale_ref, bias_ref, w_ref, bw_ref, o_ref, pooled_ref,
                      *, mm_dtype=None):
    # x_ref:      (1, C, THp, 2W)   rows 2r and 2r+1 concatenated along the last dim
    # scale_ref:  (C, 1)            folded BN scale  (gamma / sqrt(var + eps))
    # bias_ref:   (C, 1)            folded BN bias   (beta - mean * scale)
    # w_ref:      (Cout, C)         1x1 conv weight
    # bw_ref:     (W, Wp)           column-pool matrix (entries 0.25 -> carries the 1/4)
    # o_ref:      (1, Cout, THp*Wp) output tile, lane-dense
    # pooled_ref: (C, THp*Wp)       VMEM scratch holding the BN+ReLU+pooled tile
    thp = x_ref.shape[2]
    two_w = x_ref.shape[3]
    w_in = two_w // 2
    wp = bw_ref.shape[1]

    def mm(a, b):
        if mm_dtype is not None:
            a = a.astype(mm_dtype)
            b = b.astype(mm_dtype)
        return jnp.dot(a, b, preferred_element_type=jnp.float32)

    # Hoist grid-invariant operands once (no per-iteration re-broadcasts).
    s = scale_ref[...]      # (C, 1)
    b = bias_ref[...]       # (C, 1)
    bw = bw_ref[...]        # (W, Wp)

    # Per pooled output row r: BN + ReLU (VPU), H-pool as a halves-add (VPU),
    # W-pool as a tiny matmul (lane de-interleave + sum on the MXU).
    for r in range(thp):                                       # static unroll, thp small
        z = jnp.maximum(x_ref[0, :, r, :] * s + b, 0.0)        # (C, 2W)  BN + ReLU
        t = z[:, :w_in] + z[:, w_in:]                          # (C, W)   rows 2r + (2r+1)
        pooled_ref[:, r * wp:(r + 1) * wp] = mm(t, bw)         # (C, Wp)  0.25*(a+b+c+d)

    # 1x1 conv on the pooled tile: one 2D MXU matmul, single lane-dense store.
    y = mm(w_ref[...], pooled_ref[...])                        # (Cout, THp*Wp)
    o_ref[0] = y.astype(o_ref.dtype)


def _make_col_pool_matrix(W):
    """(W, Wp) matrix summing adjacent column pairs, scaled by the full 0.25 pool factor."""
    Wp = W // 2
    P = np.zeros((W, Wp), dtype=np.float32)
    for wp in range(Wp):
        P[2 * wp, wp] = 0.25
        P[2 * wp + 1, wp] = 0.25
    return P


def _choose_row_tile(c_in, hp, w, wp, elem_bytes=4, budget_bytes=2 * 1024 * 1024,
                     max_unroll=64):
    """Pick THp (pooled rows per grid step).

    Constraints (so every BlockSpec satisfies the (8,128) tiling rule):
      * THp divides Hp
      * THp == Hp (blocks equal the full dims)  OR
        THp % 8 == 0 and (THp * Wp) % 128 == 0  (tiled x / lane-dense output blocks)
    Prefers the whole image when it fits the per-block VMEM budget.
    """
    full_bytes = c_in * hp * 2 * w * elem_bytes        # whole-image block = C*H*W*elem
    if full_bytes <= budget_bytes and hp <= max_unroll:
        return hp
    best = None
    for thp in range(hp - 1, 0, -1):
        if hp % thp:
            continue
        if thp % 8:
            continue
        if (thp * wp) % 128:
            continue
        if c_in * thp * 2 * w * elem_bytes > budget_bytes:
            continue
        best = thp
        break
    return best if best is not None else hp


def transition_layer(x_nchw, gamma, beta, running_mean, running_var, conv_w,
                     eps=1e-5, *, matmul_dtype=None):
    """Pallas implementation of TransitionLayer.forward (eval-mode BatchNorm)."""
    N, C, H, W = x_nchw.shape
    assert H % 2 == 0 and W % 2 == 0, "AvgPool2d(2,2) requires even spatial dims"
    Cout = conv_w.shape[0]
    Hp, Wp = H // 2, W // 2

    # Fold eval-mode BatchNorm into a per-channel affine.
    scale = (gamma / jnp.sqrt(running_var + eps)).astype(jnp.float32)
    bias = (beta - running_mean * scale).astype(jnp.float32)

    # Free contiguous views only — NCHW is kept end to end (no HBM transpose round-trips).
    x4 = x_nchw.reshape(N, C, Hp, 2 * W)              # rows 2h, 2h+1 share a lane row
    w2d = conv_w.reshape(Cout, C).astype(jnp.float32)
    bw = jnp.asarray(_make_col_pool_matrix(W))        # (W, Wp)

    thp = _choose_row_tile(C, Hp, W, Wp)
    n_tiles = Hp // thp

    # Explicit VMEM budget (double-buffered in/out blocks + scratch + headroom),
    # kept well under v7x's 64 MiB physical VMEM.
    in_block = C * thp * 2 * W * 4
    out_block = Cout * thp * Wp * 4
    scratch_bytes = C * thp * Wp * 4
    vmem_limit = int(min(max(32 << 20,
                             2 * (in_block + out_block) + scratch_bytes + (1 << 20)),
                         56 << 20))

    # Advisory cost estimate: after removing the dense pool matmul this op is
    # bytes_accessed-dominated (HBM-bound).
    flops = N * (3 * C * H * W                 # BN affine + ReLU + H-pool adds
                 + 2 * C * Hp * W * Wp         # W-pool matmul
                 + 2 * Cout * C * Hp * Wp)     # 1x1 conv
    bytes_accessed = 4 * (N * C * H * W + N * Cout * Hp * Wp
                          + 2 * C + Cout * C + W * Wp)

    kernel = functools.partial(transition_kernel, mm_dtype=matmul_dtype)

    out = pl.pallas_call(
        kernel,
        out_shape=jax.ShapeDtypeStruct((N, Cout, Hp * Wp), x_nchw.dtype),
        grid_spec=pltpu.PrefetchScalarGridSpec(
            num_scalar_prefetch=0,
            grid=(N, n_tiles),
            in_specs=[
                pl.BlockSpec((1, C, thp, 2 * W), lambda n, t: (n, 0, t, 0)),
                pl.BlockSpec((C, 1), lambda n, t: (0, 0)),
                pl.BlockSpec((C, 1), lambda n, t: (0, 0)),
                pl.BlockSpec((Cout, C), lambda n, t: (0, 0)),
                pl.BlockSpec((W, Wp), lambda n, t: (0, 0)),
            ],
            out_specs=pl.BlockSpec((1, Cout, thp * Wp), lambda n, t: (n, 0, t)),
            scratch_shapes=[pltpu.VMEM((C, thp * Wp), jnp.float32)],
        ),
        compiler_params=pltpu.CompilerParams(
            dimension_semantics=("parallel", "parallel"),
            vmem_limit_bytes=vmem_limit,
        ),
        cost_estimate=pl.CostEstimate(flops=int(flops), transcendentals=0,
                                      bytes_accessed=int(bytes_accessed)),
    )(x4, scale.reshape(C, 1), bias.reshape(C, 1), w2d, bw)

    # (N, Cout, Hp*Wp) -> (N, Cout, Hp, Wp): free contiguous reshape, already NCHW.
    return out.reshape(N, Cout, Hp, Wp)


def _reference(x_nchw, gamma, beta, running_mean, running_var, conv_w, eps=1e-5):
    """Pure-JAX reference matching PyTorch semantics (eval-mode BN)."""
    inv_std = 1.0 / jnp.sqrt(running_var + eps)
    scale = (gamma * inv_std).reshape(1, -1, 1, 1)
    bias = (beta - running_mean * gamma * inv_std).reshape(1, -1, 1, 1)
    z = jnp.maximum(x_nchw * scale + bias, 0.0)
    w2d = conv_w.reshape(conv_w.shape[0], conv_w.shape[1])       # (Cout, Cin)
    y = jnp.einsum("nchw,oc->nohw", z, w2d)                      # 1x1 conv, no bias
    N, Co, H, W = y.shape
    return y.reshape(N, Co, H // 2, 2, W // 2, 2).mean(axis=(3, 5))


if __name__ == "__main__":
    key = jax.random.PRNGKey(0)
    k_x, k_g, k_b, k_m, k_v, k_w = jax.random.split(key, 6)

    N, Cin, Cout, H, W = 2, 8, 4, 16, 16

    x = jax.random.normal(k_x, (N, Cin, H, W), dtype=jnp.float32)

    # Deterministic synthetic parameters (shapes from the module's __init__).
    gamma = 0.5 + jax.random.uniform(k_g, (Cin,), dtype=jnp.float32)           # bn.weight
    beta = 0.1 * jax.random.normal(k_b, (Cin,), dtype=jnp.float32)             # bn.bias
    running_mean = 0.1 * jax.random.normal(k_m, (Cin,), dtype=jnp.float32)     # bn.running_mean
    running_var = 0.5 + jax.random.uniform(k_v, (Cin,), dtype=jnp.float32)     # bn.running_var
    conv_w = jax.random.normal(k_w, (Cout, Cin, 1, 1), dtype=jnp.float32) / np.sqrt(Cin)

    out = transition_layer(x, gamma, beta, running_mean, running_var, conv_w)
    out = jax.block_until_ready(out)

    ref = _reference(x, gamma, beta, running_mean, running_var, conv_w)
    assert out.shape == (N, Cout, H // 2, W // 2), out.shape
    np.testing.assert_allclose(np.asarray(out), np.asarray(ref), rtol=1e-5, atol=1e-5)

    print("KERNEL_OK")
</pallas_src>

<mosaic_0001>
module attributes {stable_mosaic.version = 11 : i64} {
  func.func @transition_kernel(%arg0: i32, %arg1: i32, %arg2: memref<1x8x8x32xf32, #tpu.memory_space<vmem>>, %arg3: memref<8x1xf32, #tpu.memory_space<vmem>>, %arg4: memref<8x1xf32, #tpu.memory_space<vmem>>, %arg5: memref<4x8xf32, #tpu.memory_space<vmem>>, %arg6: memref<16x8xf32, #tpu.memory_space<vmem>>, %arg7: memref<1x4x64xf32, #tpu.memory_space<vmem>>, %arg8: memref<8x64xf32, #tpu.memory_space<vmem>>) attributes {dimension_semantics = [#tpu.dimension_semantics<parallel>, #tpu.dimension_semantics<parallel>], iteration_bounds = array<i64: 2, 1>, scalar_prefetch = 0 : i64, scratch_operands = 1 : i64, tpu.core_type = #tpu.core_type<tc>, window_params = [{transform_indices = @transform_0, window_bounds = array<i64: 1, 8, 8, 32>}, {pipeline_mode = #tpu.pipeline_mode<synchronous>, transform_indices = @transform_1, window_bounds = array<i64: 8, 1>}, {pipeline_mode = #tpu.pipeline_mode<synchronous>, transform_indices = @transform_2, window_bounds = array<i64: 8, 1>}, {pipeline_mode = #tpu.pipeline_mode<synchronous>, transform_indices = @transform_3, window_bounds = array<i64: 4, 8>}, {pipeline_mode = #tpu.pipeline_mode<synchronous>, transform_indices = @transform_4, window_bounds = array<i64: 16, 8>}, {transform_indices = @transform_5, window_bounds = array<i64: 1, 4, 64>}]} {
    %c0 = arith.constant 0 : index
    %c0_0 = arith.constant 0 : index
    %0 = vector.load %arg3[%c0, %c0_0] : memref<8x1xf32, #tpu.memory_space<vmem>>, vector<8x1xf32>
    %c0_1 = arith.constant 0 : index
    %c0_2 = arith.constant 0 : index
    %1 = vector.load %arg4[%c0_1, %c0_2] : memref<8x1xf32, #tpu.memory_space<vmem>>, vector<8x1xf32>
    %c0_3 = arith.constant 0 : index
    %c0_4 = arith.constant 0 : index
    %2 = vector.load %arg6[%c0_3, %c0_4] : memref<16x8xf32, #tpu.memory_space<vmem>>, vector<16x8xf32>
    %c0_5 = arith.constant 0 : index
    %c0_6 = arith.constant 0 : index
    %c0_7 = arith.constant 0 : index
    %c0_8 = arith.constant 0 : index
    %3 = vector.load %arg2[%c0_5, %c0_6, %c0_7, %c0_8] : memref<1x8x8x32xf32, #tpu.memory_space<vmem>>, vector<1x8x1x32xf32>
    %4 = vector.shape_cast %3 : vector<1x8x1x32xf32> to vector<8x32xf32>
    %5 = vector.broadcast %0 : vector<8x1xf32> to vector<8x32xf32>
    %6 = arith.mulf %4, %5 : vector<8x32xf32>
    %7 = vector.broadcast %1 : vector<8x1xf32> to vector<8x32xf32>
    %8 = arith.addf %6, %7 : vector<8x32xf32>
    %cst = arith.constant 0.000000e+00 : f32
    %9 = vector.broadcast %cst : f32 to vector<8x32xf32>
    %10 = arith.maximumf %8, %9 : vector<8x32xf32>
    %11 = vector.extract_strided_slice %10 {offsets = [0, 0], sizes = [8, 16], strides = [1, 1]} : vector<8x32xf32> to vector<8x16xf32>
    %12 = vector.extract_strided_slice %10 {offsets = [0, 16], sizes = [8, 16], strides = [1, 1]} : vector<8x32xf32> to vector<8x16xf32>
    %13 = arith.addf %11, %12 : vector<8x16xf32>
    %cst_9 = arith.constant dense<0.000000e+00> : vector<8x8xf32>
    %14 = tpu.matmul %13, %2, %cst_9 {dimension_numbers = #tpu.dot_dimension_numbers<[1], [0], [0], [1], [0, 0, 1, 1], [], []>} : vector<8x16xf32>, vector<16x8xf32>, vector<8x8xf32> -> vector<8x8xf32>
    %c0_10 = arith.constant 0 : index
    %c0_11 = arith.constant 0 : index
    %15 = vector.load %arg8[%c0_10, %c0_11] : memref<8x64xf32, #tpu.memory_space<vmem>>, vector<8x8xf32>
    tpu.vector_store %arg8[%c0_10, %c0_11], %14 {strides = array<i32>} : memref<8x64xf32, #tpu.memory_space<vmem>>, vector<8x8xf32>,
    %c0_12 = arith.constant 0 : index
    %c0_13 = arith.constant 0 : index
    %c1 = arith.constant 1 : index
    %c0_14 = arith.constant 0 : index
    %16 = vector.load %arg2[%c0_12, %c0_13, %c1, %c0_14] : memref<1x8x8x32xf32, #tpu.memory_space<vmem>>, vector<1x8x1x32xf32>
    %17 = vector.shape_cast %16 : vector<1x8x1x32xf32> to vector<8x32xf32>
    %18 = vector.broadcast %0 : vector<8x1xf32> to vector<8x32xf32>
    %19 = arith.mulf %17, %18 : vector<8x32xf32>
    %20 = vector.broadcast %1 : vector<8x1xf32> to vector<8x32xf32>
    %21 = arith.addf %19, %20 : vector<8x32xf32>
    %cst_15 = arith.constant 0.000000e+00 : f32
    %22 = vector.broadcast %cst_15 : f32 to vector<8x32xf32>
    %23 = arith.maximumf %21, %22 : vector<8x32xf32>
    %24 = vector.extract_strided_slice %23 {offsets = [0, 0], sizes = [8, 16], strides = [1, 1]} : vector<8x32xf32> to vector<8x16xf32>
    %25 = vector.extract_strided_slice %23 {offsets = [0, 16], sizes = [8, 16], strides = [1, 1]} : vector<8x32xf32> to vector<8x16xf32>
    %26 = arith.addf %24, %25 : vector<8x16xf32>
    %cst_16 = arith.constant dense<0.000000e+00> : vector<8x8xf32>
    %27 = tpu.matmul %26, %2, %cst_16 {dimension_numbers = #tpu.dot_dimension_numbers<[1], [0], [0], [1], [0, 0, 1, 1], [], []>} : vector<8x16xf32>, vector<16x8xf32>, vector<8x8xf32> -> vector<8x8xf32>
    %c0_17 = arith.constant 0 : index
    %c8 = arith.constant 8 : index
    %28 = vector.load %arg8[%c0_17, %c8] : memref<8x64xf32, #tpu.memory_space<vmem>>, vector<8x8xf32>
    tpu.vector_store %arg8[%c0_17, %c8], %27 {strides = array<i32>} : memref<8x64xf32, #tpu.memory_space<vmem>>, vector<8x8xf32>,
    %c0_18 = arith.constant 0 : index
    %c0_19 = arith.constant 0 : index
    %c2 = arith.constant 2 : index
    %c0_20 = arith.constant 0 : index
    %29 = vector.load %arg2[%c0_18, %c0_19, %c2, %c0_20] : memref<1x8x8x32xf32, #tpu.memory_space<vmem>>, vector<1x8x1x32xf32>
    %30 = vector.shape_cast %29 : vector<1x8x1x32xf32> to vector<8x32xf32>
    %31 = vector.broadcast %0 : vector<8x1xf32> to vector<8x32xf32>
    %32 = arith.mulf %30, %31 : vector<8x32xf32>
    %33 = vector.broadcast %1 : vector<8x1xf32> to vector<8x32xf32>
    %34 = arith.addf %32, %33 : vector<8x32xf32>
    %cst_21 = arith.constant 0.000000e+00 : f32
    %35 = vector.broadcast %cst_21 : f32 to vector<8x32xf32>
    %36 = arith.maximumf %34, %35 : vector<8x32xf32>
    %37 = vector.extract_strided_slice %36 {offsets = [0, 0], sizes = [8, 16], strides = [1, 1]} : vector<8x32xf32> to vector<8x16xf32>
    %38 = vector.extract_strided_slice %36 {offsets = [0, 16], sizes = [8, 16], strides = [1, 1]} : vector<8x32xf32> to vector<8x16xf32>
    %39 = arith.addf %37, %38 : vector<8x16xf32>
    %cst_22 = arith.constant dense<0.000000e+00> : vector<8x8xf32>
    %40 = tpu.matmul %39, %2, %cst_22 {dimension_numbers = #tpu.dot_dimension_numbers<[1], [0], [0], [1], [0, 0, 1, 1], [], []>} : vector<8x16xf32>, vector<16x8xf32>, vector<8x8xf32> -> vector<8x8xf32>
    %c0_23 = arith.constant 0 : index
    %c16 = arith.constant 16 : index
    %41 = vector.load %arg8[%c0_23, %c16] : memref<8x64xf32, #tpu.memory_space<vmem>>, vector<8x8xf32>
    tpu.vector_store %arg8[%c0_23, %c16], %40 {strides = array<i32>} : memref<8x64xf32, #tpu.memory_space<vmem>>, vector<8x8xf32>,
    %c0_24 = arith.constant 0 : index
    %c0_25 = arith.constant 0 : index
    %c3 = arith.constant 3 : index
    %c0_26 = arith.constant 0 : index
    %42 = vector.load %arg2[%c0_24, %c0_25, %c3, %c0_26] : memref<1x8x8x32xf32, #tpu.memory_space<vmem>>, vector<1x8x1x32xf32>
    %43 = vector.shape_cast %42 : vector<1x8x1x32xf32> to vector<8x32xf32>
    %44 = vector.broadcast %0 : vector<8x1xf32> to vector<8x32xf32>
    %45 = arith.mulf %43, %44 : vector<8x32xf32>
    %46 = vector.broadcast %1 : vector<8x1xf32> to vector<8x32xf32>
    %47 = arith.addf %45, %46 : vector<8x32xf32>
    %cst_27 = arith.constant 0.000000e+00 : f32
    %48 = vector.broadcast %cst_27 : f32 to vector<8x32xf32>
    %49 = arith.maximumf %47, %48 : vector<8x32xf32>
    %50 = vector.extract_strided_slice %49 {offsets = [0, 0], sizes = [8, 16], strides = [1, 1]} : vector<8x32xf32> to vector<8x16xf32>
    %51 = vector.extract_strided_slice %49 {offsets = [0, 16], sizes = [8, 16], strides = [1, 1]} : vector<8x32xf32> to vector<8x16xf32>
    %52 = arith.addf %50, %51 : vector<8x16xf32>
    %cst_28 = arith.constant dense<0.000000e+00> : vector<8x8xf32>
    %53 = tpu.matmul %52, %2, %cst_28 {dimension_numbers = #tpu.dot_dimension_numbers<[1], [0], [0], [1], [0, 0, 1, 1], [], []>} : vector<8x16xf32>, vector<16x8xf32>, vector<8x8xf32> -> vector<8x8xf32>
    %c0_29 = arith.constant 0 : index
    %c24 = arith.constant 24 : index
    %54 = vector.load %arg8[%c0_29, %c24] : memref<8x64xf32, #tpu.memory_space<vmem>>, vector<8x8xf32>
    tpu.vector_store %arg8[%c0_29, %c24], %53 {strides = array<i32>} : memref<8x64xf32, #tpu.memory_space<vmem>>, vector<8x8xf32>,
    %c0_30 = arith.constant 0 : index
    %c0_31 = arith.constant 0 : index
    %c4 = arith.constant 4 : index
    %c0_32 = arith.constant 0 : index
    %55 = vector.load %arg2[%c0_30, %c0_31, %c4, %c0_32] : memref<1x8x8x32xf32, #tpu.memory_space<vmem>>, vector<1x8x1x32xf32>
    %56 = vector.shape_cast %55 : vector<1x8x1x32xf32> to vector<8x32xf32>
    %57 = vector.broadcast %0 : vector<8x1xf32> to vector<8x32xf32>
    %58 = arith.mulf %56, %57 : vector<8x32xf32>
    %59 = vector.broadcast %1 : vector<8x1xf32> to vector<8x32xf32>
    %60 = arith.addf %58, %59 : vector<8x32xf32>
    %cst_33 = arith.constant 0.000000e+00 : f32
    %61 = vector.broadcast %cst_33 : f32 to vector<8x32xf32>
    %62 = arith.maximumf %60, %61 : vector<8x32xf32>
    %63 = vector.extract_strided_slice %62 {offsets = [0, 0], sizes = [8, 16], strides = [1, 1]} : vector<8x32xf32> to vector<8x16xf32>
    %64 = vector.extract_strided_slice %62 {offsets = [0, 16], sizes = [8, 16], strides = [1, 1]} : vector<8x32xf32> to vector<8x16xf32>
    %65 = arith.addf %63, %64 : vector<8x16xf32>
    %cst_34 = arith.constant dense<0.000000e+00> : vector<8x8xf32>
    %66 = tpu.matmul %65, %2, %cst_34 {dimension_numbers = #tpu.dot_dimension_numbers<[1], [0], [0], [1], [0, 0, 1, 1], [], []>} : vector<8x16xf32>, vector<16x8xf32>, vector<8x8xf32> -> vector<8x8xf32>
    %c0_35 = arith.constant 0 : index
    %c32 = arith.constant 32 : index
    %67 = vector.load %arg8[%c0_35, %c32] : memref<8x64xf32, #tpu.memory_space<vmem>>, vector<8x8xf32>
    tpu.vector_store %arg8[%c0_35, %c32], %66 {strides = array<i32>} : memref<8x64xf32, #tpu.memory_space<vmem>>, vector<8x8xf32>,
    %c0_36 = arith.constant 0 : index
    %c0_37 = arith.constant 0 : index
    %c5 = arith.constant 5 : index
    %c0_38 = arith.constant 0 : index
    %68 = vector.load %arg2[%c0_36, %c0_37, %c5, %c0_38] : memref<1x8x8x32xf32, #tpu.memory_space<vmem>>, vector<1x8x1x32xf32>
    %69 = vector.shape_cast %68 : vector<1x8x1x32xf32> to vector<8x32xf32>
    %70 = vector.broadcast %0 : vector<8x1xf32> to vector<8x32xf32>
    %71 = arith.mulf %69, %70 : vector<8x32xf32>
    %72 = vector.broadcast %1 : vector<8x1xf32> to vector<8x32xf32>
    %73 = arith.addf %71, %72 : vector<8x32xf32>
    %cst_39 = arith.constant 0.000000e+00 : f32
    %74 = vector.broadcast %cst_39 : f32 to vector<8x32xf32>
    %75 = arith.maximumf %73, %74 : vector<8x32xf32>
    %76 = vector.extract_strided_slice %75 {offsets = [0, 0], sizes = [8, 16], strides = [1, 1]} : vector<8x32xf32> to vector<8x16xf32>
    %77 = vector.extract_strided_slice %75 {offsets = [0, 16], sizes = [8, 16], strides = [1, 1]} : vector<8x32xf32> to vector<8x16xf32>
    %78 = arith.addf %76, %77 : vector<8x16xf32>
    %cst_40 = arith.constant dense<0.000000e+00> : vector<8x8xf32>
    %79 = tpu.matmul %78, %2, %cst_40 {dimension_numbers = #tpu.dot_dimension_numbers<[1], [0], [0], [1], [0, 0, 1, 1], [], []>} : vector<8x16xf32>, vector<16x8xf32>, vector<8x8xf32> -> vector<8x8xf32>
    %c0_41 = arith.constant 0 : index
    %c40 = arith.constant 40 : index
    %80 = vector.load %arg8[%c0_41, %c40] : memref<8x64xf32, #tpu.memory_space<vmem>>, vector<8x8xf32>
    tpu.vector_store %arg8[%c0_41, %c40], %79 {strides = array<i32>} : memref<8x64xf32, #tpu.memory_space<vmem>>, vector<8x8xf32>,
    %c0_42 = arith.constant 0 : index
    %c0_43 = arith.constant 0 : index
    %c6 = arith.constant 6 : index
    %c0_44 = arith.constant 0 : index
    %81 = vector.load %arg2[%c0_42, %c0_43, %c6, %c0_44] : memref<1x8x8x32xf32, #tpu.memory_space<vmem>>, vector<1x8x1x32xf32>
    %82 = vector.shape_cast %81 : vector<1x8x1x32xf32> to vector<8x32xf32>
    %83 = vector.broadcast %0 : vector<8x1xf32> to vector<8x32xf32>
    %84 = arith.mulf %82, %83 : vector<8x32xf32>
    %85 = vector.broadcast %1 : vector<8x1xf32> to vector<8x32xf32>
    %86 = arith.addf %84, %85 : vector<8x32xf32>
    %cst_45 = arith.constant 0.000000e+00 : f32
    %87 = vector.broadcast %cst_45 : f32 to vector<8x32xf32>
    %88 = arith.maximumf %86, %87 : vector<8x32xf32>
    %89 = vector.extract_strided_slice %88 {offsets = [0, 0], sizes = [8, 16], strides = [1, 1]} : vector<8x32xf32> to vector<8x16xf32>
    %90 = vector.extract_strided_slice %88 {offsets = [0, 16], sizes = [8, 16], strides = [1, 1]} : vector<8x32xf32> to vector<8x16xf32>
    %91 = arith.addf %89, %90 : vector<8x16xf32>
    %cst_46 = arith.constant dense<0.000000e+00> : vector<8x8xf32>
    %92 = tpu.matmul %91, %2, %cst_46 {dimension_numbers = #tpu.dot_dimension_numbers<[1], [0], [0], [1], [0, 0, 1, 1], [], []>} : vector<8x16xf32>, vector<16x8xf32>, vector<8x8xf32> -> vector<8x8xf32>
    %c0_47 = arith.constant 0 : index
    %c48 = arith.constant 48 : index
    %93 = vector.load %arg8[%c0_47, %c48] : memref<8x64xf32, #tpu.memory_space<vmem>>, vector<8x8xf32>
    tpu.vector_store %arg8[%c0_47, %c48], %92 {strides = array<i32>} : memref<8x64xf32, #tpu.memory_space<vmem>>, vector<8x8xf32>,
    %c0_48 = arith.constant 0 : index
    %c0_49 = arith.constant 0 : index
    %c7 = arith.constant 7 : index
    %c0_50 = arith.constant 0 : index
    %94 = vector.load %arg2[%c0_48, %c0_49, %c7, %c0_50] : memref<1x8x8x32xf32, #tpu.memory_space<vmem>>, vector<1x8x1x32xf32>
    %95 = vector.shape_cast %94 : vector<1x8x1x32xf32> to vector<8x32xf32>
    %96 = vector.broadcast %0 : vector<8x1xf32> to vector<8x32xf32>
    %97 = arith.mulf %95, %96 : vector<8x32xf32>
    %98 = vector.broadcast %1 : vector<8x1xf32> to vector<8x32xf32>
    %99 = arith.addf %97, %98 : vector<8x32xf32>
    %cst_51 = arith.constant 0.000000e+00 : f32
    %100 = vector.broadcast %cst_51 : f32 to vector<8x32xf32>
    %101 = arith.maximumf %99, %100 : vector<8x32xf32>
    %102 = vector.extract_strided_slice %101 {offsets = [0, 0], sizes = [8, 16], strides = [1, 1]} : vector<8x32xf32> to vector<8x16xf32>
    %103 = vector.extract_strided_slice %101 {offsets = [0, 16], sizes = [8, 16], strides = [1, 1]} : vector<8x32xf32> to vector<8x16xf32>
    %104 = arith.addf %102, %103 : vector<8x16xf32>
    %cst_52 = arith.constant dense<0.000000e+00> : vector<8x8xf32>
    %105 = tpu.matmul %104, %2, %cst_52 {dimension_numbers = #tpu.dot_dimension_numbers<[1], [0], [0], [1], [0, 0, 1, 1], [], []>} : vector<8x16xf32>, vector<16x8xf32>, vector<8x8xf32> -> vector<8x8xf32>
    %c0_53 = arith.constant 0 : index
    %c56 = arith.constant 56 : index
    %106 = vector.load %arg8[%c0_53, %c56] : memref<8x64xf32, #tpu.memory_space<vmem>>, vector<8x8xf32>
    tpu.vector_store %arg8[%c0_53, %c56], %105 {strides = array<i32>} : memref<8x64xf32, #tpu.memory_space<vmem>>, vector<8x8xf32>,
    %c0_54 = arith.constant 0 : index
    %c0_55 = arith.constant 0 : index
    %107 = vector.load %arg5[%c0_54, %c0_55] : memref<4x8xf32, #tpu.memory_space<vmem>>, vector<4x8xf32>
    %c0_56 = arith.constant 0 : index
    %c0_57 = arith.constant 0 : index
    %108 = vector.load %arg8[%c0_56, %c0_57] : memref<8x64xf32, #tpu.memory_space<vmem>>, vector<8x64xf32>
    %cst_58 = arith.constant dense<0.000000e+00> : vector<4x64xf32>
    %109 = tpu.matmul %107, %108, %cst_58 {dimension_numbers = #tpu.dot_dimension_numbers<[1], [0], [0], [1], [0, 0, 1, 1], [], []>} : vector<4x8xf32>, vector<8x64xf32>, vector<4x64xf32> -> vector<4x64xf32>
    %c0_59 = arith.constant 0 : index
    %c0_60 = arith.constant 0 : index
    %c0_61 = arith.constant 0 : index
    %110 = vector.load %arg7[%c0_59, %c0_60, %c0_61] : memref<1x4x64xf32, #tpu.memory_space<vmem>>, vector<1x4x64xf32>
    %111 = vector.shape_cast %110 : vector<1x4x64xf32> to vector<4x64xf32>
    %112 = vector.shape_cast %109 : vector<4x64xf32> to vector<1x4x64xf32>
    tpu.vector_store %arg7[%c0_59, %c0_60, %c0_61], %112 {strides = array<i32>} : memref<1x4x64xf32, #tpu.memory_space<vmem>>, vector<1x4x64xf32>,
    return
  }
  func.func @transform_0(%arg0: i32, %arg1: i32) -> (i32, i32, i32, i32) {
    %c0_i32 = arith.constant 0 : i32
    %c0_i32_0 = arith.constant 0 : i32
    %c0_i32_1 = arith.constant 0 : i32
    return %arg0, %c0_i32, %arg1, %c0_i32_0 : i32, i32, i32, i32
  }
  func.func @transform_1(%arg0: i32, %arg1: i32) -> (i32, i32) {
    %c0_i32 = arith.constant 0 : i32
    %c0_i32_0 = arith.constant 0 : i32
    %c0_i32_1 = arith.constant 0 : i32
    return %c0_i32, %c0_i32_0 : i32, i32
  }
  func.func @transform_2(%arg0: i32, %arg1: i32) -> (i32, i32) {
    %c0_i32 = arith.constant 0 : i32
    %c0_i32_0 = arith.constant 0 : i32
    %c0_i32_1 = arith.constant 0 : i32
    return %c0_i32, %c0_i32_0 : i32, i32
  }
  func.func @transform_3(%arg0: i32, %arg1: i32) -> (i32, i32) {
    %c0_i32 = arith.constant 0 : i32
    %c0_i32_0 = arith.constant 0 : i32
    %c0_i32_1 = arith.constant 0 : i32
    return %c0_i32, %c0_i32_0 : i32, i32
  }
  func.func @transform_4(%arg0: i32, %arg1: i32) -> (i32, i32) {
    %c0_i32 = arith.constant 0 : i32
    %c0_i32_0 = arith.constant 0 : i32
    %c0_i32_1 = arith.constant 0 : i32
    return %c0_i32, %c0_i32_0 : i32, i32
  }
  func.func @transform_5(%arg0: i32, %arg1: i32) -> (i32, i32, i32) {
    %c0_i32 = arith.constant 0 : i32
    %c0_i32_0 = arith.constant 0 : i32
    return %arg0, %c0_i32, %arg1 : i32, i32, i32
  }
}

</mosaic_0001>

<llo_original>
// kernel: tpu_custom_call.1
$region0: #{tpu_custom_call.1}
  #allocation0 [shape = 'u32[]', space=smem, size = 0x4, offset = 0x4, fixed_abs, tag = 'smem constant byte address 0x4 - core index']
  #allocation1 [shape = 'u32[144,128]{1,0:T(1,128)}', space=vmem, size = 0x12000, scoped, tag = 'internal scratch']
  #allocation2 [shape = 'f32[8,64]{1,0:T(8,128)}', space=vmem, size = 0x1000, scoped, tag = 'scratch operand']
  %s0 = inlined_call_operand.hbm [shape: f32[2,8,8,32], index: 0, kind: input, shape index: {}]
  %s1 = inlined_call_operand.vmem [shape: f32[8,1], index: 1, kind: input, shape index: {}]
  %s2 = inlined_call_operand.vmem [shape: f32[8,1], index: 2, kind: input, shape index: {}]
  %s3 = inlined_call_operand.vmem [shape: f32[4,8], index: 3, kind: input, shape index: {}]
  %s4 = inlined_call_operand.vmem [shape: f32[16,8], index: 4, kind: input, shape index: {}]
  %s5 = inlined_call_operand.hbm [shape: f32[2,4,64], index: 5, kind: output, shape index: {}]
  %s6 = sld [smem:[#allocation0]]
  $region57: #{tpu_custom_call.1} parent=0
    _
  %s8 = ssub.s32 1, %s6
  %s9 = scalar_select 0, %s8, %s6
  $region1: #{tpu_custom_call.1} parent=0
    #allocation3 [shape = 'u8[65536]{0}', space=vmem, size = 0x10000, scoped, tag = 'input window, operand 0']
    #allocation4 [shape = 's32[2]{0}', space=sflag, size = 0x8, scoped, tag = 'scoped memory for tpu_custom_call.1']
    #allocation5 [shape = 's32[2]{0}', space=sflag, size = 0x8, scoped, tag = 'scoped memory for tpu_custom_call.1']
    #allocation6 [shape = 'u8[4096]{0}', space=vmem, size = 0x1000, scoped, tag = 'output window, operand 0']
    %10 = vsyncpa [#allocation4], 0
    %s11 = scalar_lea.sflag [#allocation4], 1
    %12 = vsyncpa %s11, 0
    %13 = vsyncpa [#allocation5], 0
    %s14 = scalar_lea.sflag [#allocation5], 1
    %15 = vsyncpa %s14, 0
    loop: start=0, step=1, limit=4
    $region2: #{tpu_custom_call.1} parent=1 // loop_pre_header
      _
    $region3: #{tpu_custom_call.1} parent=1 // loop_header
      %s17 = sphi 0, %s21
      %p18 = scmp.ge.s32.totalorder %s17, 4
      %s24 = sphi 0, %s36
      %s25 = sphi 0, %s32
      %s26 = sphi 0, %s24
      %s27 = sphi 0, %s25
      %s28 = sphi 0, %s26
      %s29 = sphi 0, %s27
      %s41 = sphi 0, %s43
      %s44 = sphi 0, %s41
      %s45 = sphi 0, %s44
      %s61 = sphi 0, %s45
      %s65 = sphi 0, %s65
      %s67 = sphi 0, %s65
      %s68 = sphi 0, %s67
      %s82 = sphi 0, %s68
      %s86 = sphi 0, %s86
      %s88 = sphi 0, %s86
      %s89 = sphi 0, %s88
      %s103 = sphi 0, %s89
      %s107 = sphi 0, %s107
      %s109 = sphi 0, %s107
      %s110 = sphi 0, %s109
      %s124 = sphi 0, %s110
      %s128 = sphi 0, %s128
      %s130 = sphi 0, %s128
      %s131 = sphi 0, %s130
      %s145 = sphi 0, %s131
      %s153 = sphi 0, %s155
      %s156 = sphi 0, %s153
      %s157 = sphi 0, %s156
      %s173 = sphi 0, %s157
    $region4: #{tpu_custom_call.1} parent=1 // loop_header_branch
      %20 = sbr.rel (%p18) target = $region8
    $region5: #{tpu_custom_call.1} parent=1 // loop_body
      %s22 = ssub.s32 %s17, 1
      %s23 = ssub.s32 %s17, 2
      %s30 = sadd.s32 1, %s25
      %p31 = scmp.ge.s32.totalorder %s30, 1
      %s32 = scalar_select %p31, 0, %s30
      %s33 = sadd.s32 1, %s24
      %s34 = scalar_select %p31, %s33, %s24
      %p35 = scmp.ge.s32.totalorder %s34, 2
      %s36 = scalar_select %p35, 0, %s34
      %s37 = ssub.s32 %s24, %s36
      %s38 = ssub.s32 %s25, %s32
      %s39 = sor.u32 %s37, %s38
      %p40 = scmp.eq.s32.totalorder %s39, 0
      %s42 = sadd.s32 %s41, 1
      %s43 = scalar_select %p40, %s41, %s42
      %p46 = pneg %p40
      %p47 = scmp.eq.s32.totalorder %s17, 1
      %p48 = por %p46, %p47
      %p49 = scmp.ne.s32.totalorder %s41, %s44
      %p50 = scmp.eq.s32.totalorder %s17, 0
      %p51 = por %p49, %p50
      %p52 = scmp.ne.s32.totalorder %s41, %s44
      %p53 = scmp.eq.s32.totalorder %s22, 1
      %p54 = por %p52, %p53
      %p55 = scmp.ne.s32.totalorder %s44, %s45
      %p56 = scmp.eq.s32.totalorder %s22, 0
      %p57 = por %p55, %p56
      %p58 = scmp.ne.s32.totalorder %s44, %s45
      %p59 = scmp.eq.s32.totalorder %s23, 1
      %p60 = por %p58, %p59
      %p62 = scmp.ne.s32.totalorder %s45, %s61
      %p63 = scmp.eq.s32.totalorder %s23, 0
      %p64 = por %p62, %p63
      %s66 = sadd.s32 %s65, 1
      %p69 = scmp.eq.s32.totalorder %s17, 1
      %p70 = scmp.ne.s32.totalorder %s65, %s67
      %p71 = scmp.eq.s32.totalorder %s17, 0
      %p72 = por %p70, %p71
      %p73 = scmp.ne.s32.totalorder %s65, %s67
      %p74 = scmp.eq.s32.totalorder %s22, 1
      %p75 = por %p73, %p74
      %p76 = scmp.ne.s32.totalorder %s67, %s68
      %p77 = scmp.eq.s32.totalorder %s22, 0
      %p78 = por %p76, %p77
      %p79 = scmp.ne.s32.totalorder %s67, %s68
      %p80 = scmp.eq.s32.totalorder %s23, 1
      %p81 = por %p79, %p80
      %p83 = scmp.ne.s32.totalorder %s68, %s82
      %p84 = scmp.eq.s32.totalorder %s23, 0
      %p85 = por %p83, %p84
      %s87 = sadd.s32 %s86, 1
      %p90 = scmp.eq.s32.totalorder %s17, 1
      %p91 = scmp.ne.s32.totalorder %s86, %s88
      %p92 = scmp.eq.s32.totalorder %s17, 0
      %p93 = por %p91, %p92
      %p94 = scmp.ne.s32.totalorder %s86, %s88
      %p95 = scmp.eq.s32.totalorder %s22, 1
      %p96 = por %p94, %p95
      %p97 = scmp.ne.s32.totalorder %s88, %s89
      %p98 = scmp.eq.s32.totalorder %s22, 0
      %p99 = por %p97, %p98
      %p100 = scmp.ne.s32.totalorder %s88, %s89
      %p101 = scmp.eq.s32.totalorder %s23, 1
      %p102 = por %p100, %p101
      %p104 = scmp.ne.s32.totalorder %s89, %s103
      %p105 = scmp.eq.s32.totalorder %s23, 0
      %p106 = por %p104, %p105
      %s108 = sadd.s32 %s107, 1
      %p111 = scmp.eq.s32.totalorder %s17, 1
      %p112 = scmp.ne.s32.totalorder %s107, %s109
      %p113 = scmp.eq.s32.totalorder %s17, 0
      %p114 = por %p112, %p113
      %p115 = scmp.ne.s32.totalorder %s107, %s109
      %p116 = scmp.eq.s32.totalorder %s22, 1
      %p117 = por %p115, %p116
      %p118 = scmp.ne.s32.totalorder %s109, %s110
      %p119 = scmp.eq.s32.totalorder %s22, 0
      %p120 = por %p118, %p119
      %p121 = scmp.ne.s32.totalorder %s109, %s110
      %p122 = scmp.eq.s32.totalorder %s23, 1
      %p123 = por %p121, %p122
      %p125 = scmp.ne.s32.totalorder %s110, %s124
      %p126 = scmp.eq.s32.totalorder %s23, 0
      %p127 = por %p125, %p126
      %s129 = sadd.s32 %s128, 1
      %p132 = scmp.eq.s32.totalorder %s17, 1
      %p133 = scmp.ne.s32.totalorder %s128, %s130
      %p134 = scmp.eq.s32.totalorder %s17, 0
      %p135 = por %p133, %p134
      %p136 = scmp.ne.s32.totalorder %s128, %s130
      %p137 = scmp.eq.s32.totalorder %s22, 1
      %p138 = por %p136, %p137
      %p139 = scmp.ne.s32.totalorder %s130, %s131
      %p140 = scmp.eq.s32.totalorder %s22, 0
      %p141 = por %p139, %p140
      %p142 = scmp.ne.s32.totalorder %s130, %s131
      %p143 = scmp.eq.s32.totalorder %s23, 1
      %p144 = por %p142, %p143
      %p146 = scmp.ne.s32.totalorder %s131, %s145
      %p147 = scmp.eq.s32.totalorder %s23, 0
      %p148 = por %p146, %p147
      %s149 = ssub.s32 %s24, %s36
      %s150 = ssub.s32 %s25, %s32
      %s151 = sor.u32 %s149, %s150
      %p152 = scmp.eq.s32.totalorder %s151, 0
      %s154 = sadd.s32 %s153, 1
      %s155 = scalar_select %p152, %s153, %s154
      %p158 = pneg %p152
      %p159 = scmp.eq.s32.totalorder %s17, 1
      %p160 = por %p158, %p159
      %p161 = scmp.ne.s32.totalorder %s153, %s156
      %p162 = scmp.eq.s32.totalorder %s17, 0
      %p163 = por %p161, %p162
      %p164 = scmp.ne.s32.totalorder %s153, %s156
      %p165 = scmp.eq.s32.totalorder %s22, 1
      %p166 = por %p164, %p165
      %p167 = scmp.ne.s32.totalorder %s156, %s157
      %p168 = scmp.eq.s32.totalorder %s22, 0
      %p169 = por %p167, %p168
      %p170 = scmp.ne.s32.totalorder %s156, %s157
      %p171 = scmp.eq.s32.totalorder %s23, 1
      %p172 = por %p170, %p171
      %p174 = scmp.ne.s32.totalorder %s157, %s173
      %p175 = scmp.eq.s32.totalorder %s23, 0
      %p176 = por %p174, %p175
      %p177 = scmp.le.s32.totalorder 1, %s17
      %p178 = scmp.lt.s32.totalorder %s17, 3
      %p179 = pnand %p177, %p178
      %p180 = pneg %p179
      // Predicated region
      $region9: #{tpu_custom_call.1} parent=5 // pred_check
        _
      $region10: #{tpu_custom_call.1} parent=5 // pred_check_branch
        %182 = sbr.rel (%p179) target = $region12
      $region11: #{tpu_custom_call.1} parent=5 // pred_region
        %s183 = ssub.s32 %s17, 1
        // Predicated region
        $region13: #{tpu_custom_call.1} parent=11 // pred_check
          %p184 = pneg %p78
        $region14: #{tpu_custom_call.1} parent=11 // pred_check_branch
          %186 = sbr.rel (%p184) target = $region16
        $region15: #{tpu_custom_call.1} parent=11 // pred_region
          _
        $region16: #{tpu_custom_call.1} parent=11 // pred_fallthru
          _
        // Predicated region
        $region17: #{tpu_custom_call.1} parent=11 // pred_check
          %p187 = pneg %p99
        $region18: #{tpu_custom_call.1} parent=11 // pred_check_branch
          %189 = sbr.rel (%p187) target = $region20
        $region19: #{tpu_custom_call.1} parent=11 // pred_region
          _
        $region20: #{tpu_custom_call.1} parent=11 // pred_fallthru
          _
        // Predicated region
        $region21: #{tpu_custom_call.1} parent=11 // pred_check
          %p190 = pneg %p120
        $region22: #{tpu_custom_call.1} parent=11 // pred_check_branch
          %192 = sbr.rel (%p190) target = $region24
        $region23: #{tpu_custom_call.1} parent=11 // pred_region
          _
        $region24: #{tpu_custom_call.1} parent=11 // pred_fallthru
          _
        // Predicated region
        $region25: #{tpu_custom_call.1} parent=11 // pred_check
          %p193 = pneg %p141
        $region26: #{tpu_custom_call.1} parent=11 // pred_check_branch
          %195 = sbr.rel (%p193) target = $region28
        $region27: #{tpu_custom_call.1} parent=11 // pred_region
          _
        $region28: #{tpu_custom_call.1} parent=11 // pred_fallthru
          _
      $region12: #{tpu_custom_call.1} parent=5 // pred_fallthru
        _
      %p196 = scmp.lt.s32.totalorder %s17, 2
      // Predicated region
      $region29: #{tpu_custom_call.1} parent=5 // pred_check
        %p197 = pneg %p196
      $region30: #{tpu_custom_call.1} parent=5 // pred_check_branch
        %199 = sbr.rel (%p197) target = $region32
      $region31: #{tpu_custom_call.1} parent=5 // pred_region
        // Predicated region
        $region33: #{tpu_custom_call.1} parent=31 // pred_check
          %p200 = pneg %p51
        $region34: #{tpu_custom_call.1} parent=31 // pred_check_branch
          %202 = sbr.rel (%p200) target = $region36
        $region35: #{tpu_custom_call.1} parent=31 // pred_region
          %s203 = sand.u32 %s41, 1
          %s204 = scalar_lea.sflag [#allocation4], %s203
          %s205 = sand.u32 %s41, 1
          %s206 = smul.addr %s205, 64
          %s207 = scalar_lea.vmem [#allocation3], %s206
          %s209 = ssub.s32 1024, 1024
          %210 = vsyncadd %s204, %s209
          %s211 = smul.addr %s24, 8
          %s212 = sadd.s32 %s25, %s211
          %s213 = smul.addr %s212, 128
          %s214 = scalar_lea.hbm %s0, %s213
          %s215 = sshll.u32 %s207, 4
          %s216 = int_to_ptr.vmem [resolvable:$true] %s215
          %221 = dma.hbm_to_vmem [thread:$0]  %s214, 1024, %s216, %s204, 128, 128, 8
        $region36: #{tpu_custom_call.1} parent=31 // pred_fallthru
          _
      $region32: #{tpu_custom_call.1} parent=5 // pred_fallthru
        _
      %p222 = scmp.le.s32.totalorder 1, %s17
      %p223 = scmp.lt.s32.totalorder %s17, 3
      %p224 = pnand %p222, %p223
      %p225 = pneg %p224
      // Predicated region
      $region37: #{tpu_custom_call.1} parent=5 // pred_check
        _
      $region38: #{tpu_custom_call.1} parent=5 // pred_check_branch
        %227 = sbr.rel (%p224) target = $region40
      $region39: #{tpu_custom_call.1} parent=5 // pred_region
        %s228 = ssub.s32 %s17, 1
        %s229 = sand.u32 %s44, 1
        %s230 = scalar_lea.sflag [#allocation4], %s229
        %s231 = sand.u32 %s44, 1
        %s232 = smul.addr %s231, 64
        %s233 = scalar_lea.vmem [#allocation3], %s232
        // Predicated region
        $region41: #{tpu_custom_call.1} parent=39 // pred_check
          %p234 = pneg %p57
        $region42: #{tpu_custom_call.1} parent=39 // pred_check_branch
          %236 = sbr.rel (%p234) target = $region44
        $region43: #{tpu_custom_call.1} parent=39 // pred_region
          %237 = dma.done %s230, 1024
        $region44: #{tpu_custom_call.1} parent=39 // pred_fallthru
          _
        %s238 = sand.u32 %s44, 1
        %s239 = scalar_lea.sflag [#allocation4], %s238
        %s240 = sand.u32 %s44, 1
        %s241 = smul.addr %s240, 64
        %s242 = scalar_lea.vmem [#allocation3], %s241
        %p243 = pneg %p57
        %p244 = pneg %p54
        %p245 = pneg %p78
        %p246 = pneg %p75
        %p247 = pneg %p99
        %p248 = pneg %p96
        %p249 = pneg %p120
        %p250 = pneg %p117
        %p251 = pneg %p141
        %p252 = pneg %p138
        %p253 = pneg %p169
        %p254 = pneg %p166
        %s255 = sand.u32 %s156, 1
        %s256 = scalar_lea.sflag [#allocation5], %s255
        %s257 = sand.u32 %s156, 1
        %s258 = smul.addr %s257, 4
        %s259 = scalar_lea.vmem [#allocation6], %s258
        %v260 = vld [vmem:[%s1] sm:$0xff]
        %v261 = vld [vmem:[%s2] sm:$0xff]
        %v262 = vld [vmem:[%s4] sm:$0xff]
        %v263 = vld [vmem:[%s4 + $0x8] sm:$0xff]
        %v264 = vld [vmem:[%s233] sm:$0x1]
        %v265 = vld [vmem:[%s233 + $0x8] sm:$0x1]
        %v266 = vld [vmem:[%s233 + $0x10] sm:$0x1]
        %v267 = vld [vmem:[%s233 + $0x18] sm:$0x1]
        %v268 = vld [vmem:[%s233 + $0x20] sm:$0x1]
        %v269 = vld [vmem:[%s233 + $0x28] sm:$0x1]
        %v270 = vld [vmem:[%s233 + $0x30] sm:$0x1]
        %v271 = vld [vmem:[%s233 + $0x38] sm:$0x1]
        %273 = vset.pattern.permute.xlu0 0
        %274 = vperm.xlu0 %273, %v260
        %v275 = vpop.permute.xlu0 %274
        %v276 = vrot.slane %v275, 1
        %v277 = vrot.slane %v275, 2
        %v278 = vrot.slane %v275, 3
        %v279 = vrot.slane %v275, 4
        %v280 = vrot.slane %v275, 5
        %v281 = vrot.slane %v275, 6
        %v282 = vrot.slane %v275, 7
        %v291 = vmul.f32 %v264, %v275
        %v292 = vmul.f32 %v265, %v276
        %v293 = vmul.f32 %v266, %v277
        %v294 = vmul.f32 %v267, %v278
        %v295 = vmul.f32 %v268, %v279
        %v296 = vmul.f32 %v269, %v280
        %v297 = vmul.f32 %v270, %v281
        %v298 = vmul.f32 %v271, %v282
        %300 = vset.pattern.permute.xlu0 0
        %301 = vperm.xlu0 %300, %v261
        %v302 = vpop.permute.xlu0 %301
        %v303 = vrot.slane %v302, 1
        %v304 = vrot.slane %v302, 2
        %v305 = vrot.slane %v302, 3
        %v306 = vrot.slane %v302, 4
        %v307 = vrot.slane %v302, 5
        %v308 = vrot.slane %v302, 6
        %v309 = vrot.slane %v302, 7
        %v318 = vadd.f32 %v291, %v302
        %v319 = vadd.f32 %v292, %v303
        %v320 = vadd.f32 %v293, %v304
        %v321 = vadd.f32 %v294, %v305
        %v322 = vadd.f32 %v295, %v306
        %v323 = vadd.f32 %v296, %v307
        %v324 = vadd.f32 %v297, %v308
        %v325 = vadd.f32 %v298, %v309
        %v326 = vmax.f32 %v318, 0.0
        %v327 = vmax.f32 %v319, 0.0
        %v328 = vmax.f32 %v320, 0.0
        %v329 = vmax.f32 %v321, 0.0
        %v330 = vmax.f32 %v322, 0.0
        %v331 = vmax.f32 %v323, 0.0
        %v332 = vmax.f32 %v324, 0.0
        %v333 = vmax.f32 %v325, 0.0
        %342 = vrot.lane.b32.xlu0 %v326, 112
        %v343 = vpop.permute.xlu0 %342
        %344 = vrot.lane.b32.xlu0 %v327, 112
        %v345 = vpop.permute.xlu0 %344
        %346 = vrot.lane.b32.xlu0 %v328, 112
        %v347 = vpop.permute.xlu0 %346
        %348 = vrot.lane.b32.xlu0 %v329, 112
        %v349 = vpop.permute.xlu0 %348
        %350 = vrot.lane.b32.xlu0 %v330, 112
        %v351 = vpop.permute.xlu0 %350
        %352 = vrot.lane.b32.xlu0 %v331, 112
        %v353 = vpop.permute.xlu0 %352
        %354 = vrot.lane.b32.xlu0 %v332, 112
        %v355 = vpop.permute.xlu0 %354
        %356 = vrot.lane.b32.xlu0 %v333, 112
        %v357 = vpop.permute.xlu0 %356
        %v366 = vadd.f32 %v326, %v343
        %v367 = vadd.f32 %v327, %v345
        %v368 = vadd.f32 %v328, %v347
        %v369 = vadd.f32 %v329, %v349
        %v370 = vadd.f32 %v330, %v351
        %v371 = vadd.f32 %v331, %v353
        %v372 = vadd.f32 %v332, %v355
        %v373 = vadd.f32 %v333, %v357
        %v382 = vrot.slane %v367, 7
        %vm383 = vcmask 1041409
        %v384 = vsel %vm383, %v382, %v366
        %v385 = vrot.slane %v368, 6
        %vm386 = vcmask 1042434
        %v387 = vsel %vm386, %v385, %v384
        %v388 = vrot.slane %v369, 5
        %vm389 = vcmask 1043459
        %v390 = vsel %vm389, %v388, %v387
        %v391 = vrot.slane %v370, 4
        %vm392 = vcmask 1044484
        %v393 = vsel %vm392, %v391, %v390
        %v394 = vrot.slane %v371, 3
        %vm395 = vcmask 1045509
        %v396 = vsel %vm395, %v394, %v393
        %v397 = vrot.slane %v372, 2
        %vm398 = vcmask 1046534
        %v399 = vsel %vm398, %v397, %v396
        %v400 = vrot.slane %v373, 1
        %vm401 = vcmask 1047559
        %v402 = vsel %vm401, %v400, %v399
        %vm403 = vcmask 130048
        %v404 = vsel %vm403, %v402, 0
        %406 = vmatprep.subr.mxu0 0.0
        %407 = vmatpush1.msra.mxu0 0.0
        %408 = vmatprep.subr.mxu0 0.0
        %409 = vmatpush1.msra.mxu0 0.0
        %410 = vmatprep.subr.mxu0 0.0
        %411 = vmatpush1.msra.mxu0 0.0
        %412 = vmatprep.subr.mxu0 0.0
        %413 = vmatpush1.msra.mxu0 0.0
        %414 = vmatprep.subr.mxu0 0.0
        %415 = vmatpush1.msra.mxu0 0.0
        %416 = vmatprep.subr.mxu0 0.0
        %417 = vmatpush1.msra.mxu0 0.0
        %418 = vmatprep.subr.mxu0 0.0
        %419 = vmatpush1.msra.mxu0 0.0
        %420 = vmatprep.subr.mxu0 0.0
        %421 = vmatpush1.msra.mxu0 0.0
        %422 = vmatprep.subr.mxu0 0.0
        %423 = vmatpush1.msra.mxu0 0.0
        %424 = vmatprep.subr.mxu0 0.0
        %425 = vmatpush1.msra.mxu0 0.0
        %426 = vmatprep.subr.mxu0 0.0
        %427 = vmatpush1.msra.mxu0 0.0
        %428 = vmatprep.subr.mxu0 0.0
        %429 = vmatpush1.msra.mxu0 0.0
        %430 = vmatprep.subr.mxu0 0.0
        %431 = vmatpush1.msra.mxu0 0.0
        %432 = vmatprep.subr.mxu0 0.0
        %433 = vmatpush1.msra.mxu0 0.0
        %434 = vmatprep.subr.mxu0 0.0
        %435 = vmatpush1.msra.mxu0 %v263
        %436 = vmatprep.subr.mxu0 0.0
        %437 = vmatpush1.msra.mxu0 %v262
        %438 = vmatprep.subr.mxu0 0.0
        %439 = vmatpush2.msra.mxu0 0.0
        %440 = vmatprep.subr.mxu0 0.0
        %441 = vmatpush2.msra.mxu0 0.0
        %442 = vmatprep.subr.mxu0 0.0
        %443 = vmatpush2.msra.mxu0 0.0
        %444 = vmatprep.subr.mxu0 0.0
        %445 = vmatpush2.msra.mxu0 0.0
        %446 = vmatprep.subr.mxu0 0.0
        %447 = vmatpush2.msra.mxu0 0.0
        %448 = vmatprep.subr.mxu0 0.0
        %449 = vmatpush2.msra.mxu0 0.0
        %450 = vmatprep.subr.mxu0 0.0
        %451 = vmatpush2.msra.mxu0 0.0
        %452 = vmatprep.subr.mxu0 0.0
        %453 = vmatpush2.msra.mxu0 0.0
        %454 = vmatprep.subr.mxu0 0.0
        %455 = vmatpush2.msra.mxu0 0.0
        %456 = vmatprep.subr.mxu0 0.0
        %457 = vmatpush2.msra.mxu0 0.0
        %458 = vmatprep.subr.mxu0 0.0
        %459 = vmatpush2.msra.mxu0 0.0
        %460 = vmatprep.subr.mxu0 0.0
        %461 = vmatpush2.msra.mxu0 0.0
        %462 = vmatprep.subr.mxu0 0.0
        %463 = vmatpush2.msra.mxu0 0.0
        %464 = vmatprep.subr.mxu0 0.0
        %465 = vmatpush2.msra.mxu0 0.0
        %466 = vmatprep.subr.mxu0 0.0
        %467 = vmatpush2.msra.mxu0 0.0
        %468 = vmatprep.subr.mxu0 0.0
        %469 = vmatpush2.msra.mxu0 0.0
        %470 = vmatprep.mubr.f32.mxu0 0.0
        %471 = vmatmul.mubr.f32.gmra.mxu0 %v404
        %v472 = vpop.f32.mrf.mxu0
        %v473 = vadd.f32 0.0, %v472
        %v474 = vpop.f32.mrf.mxu0
        %475 = vdwg.mxu0
        %vm476 = vcmask 64512
        %477 = vst.msk [vmem:[#allocation2] sm:$0xff] %vm476, %v473
        %v478 = vld [vmem:[%s233 + $0x1] sm:$0x1]
        %v479 = vld [vmem:[%s233 + $0x9] sm:$0x1]
        %v480 = vld [vmem:[%s233 + $0x11] sm:$0x1]
        %v481 = vld [vmem:[%s233 + $0x19] sm:$0x1]
        %v482 = vld [vmem:[%s233 + $0x21] sm:$0x1]
        %v483 = vld [vmem:[%s233 + $0x29] sm:$0x1]
        %v484 = vld [vmem:[%s233 + $0x31] sm:$0x1]
        %v485 = vld [vmem:[%s233 + $0x39] sm:$0x1]
        %v486 = vmul.f32 %v478, %v275
        %v487 = vmul.f32 %v479, %v276
        %v488 = vmul.f32 %v480, %v277
        %v489 = vmul.f32 %v481, %v278
        %v490 = vmul.f32 %v482, %v279
        %v491 = vmul.f32 %v483, %v280
        %v492 = vmul.f32 %v484, %v281
        %v493 = vmul.f32 %v485, %v282
        %v494 = vadd.f32 %v486, %v302
        %v495 = vadd.f32 %v487, %v303
        %v496 = vadd.f32 %v488, %v304
        %v497 = vadd.f32 %v489, %v305
        %v498 = vadd.f32 %v490, %v306
        %v499 = vadd.f32 %v491, %v307
        %v500 = vadd.f32 %v492, %v308
        %v501 = vadd.f32 %v493, %v309
        %v502 = vmax.f32 %v494, 0.0
        %v503 = vmax.f32 %v495, 0.0
        %v504 = vmax.f32 %v496, 0.0
        %v505 = vmax.f32 %v497, 0.0
        %v506 = vmax.f32 %v498, 0.0
        %v507 = vmax.f32 %v499, 0.0
        %v508 = vmax.f32 %v500, 0.0
        %v509 = vmax.f32 %v501, 0.0
        %518 = vrot.lane.b32.xlu0 %v502, 112
        %v519 = vpop.permute.xlu0 %518
        %520 = vrot.lane.b32.xlu0 %v503, 112
        %v521 = vpop.permute.xlu0 %520
        %522 = vrot.lane.b32.xlu0 %v504, 112
        %v523 = vpop.permute.xlu0 %522
        %524 = vrot.lane.b32.xlu0 %v505, 112
        %v525 = vpop.permute.xlu0 %524
        %526 = vrot.lane.b32.xlu0 %v506, 112
        %v527 = vpop.permute.xlu0 %526
        %528 = vrot.lane.b32.xlu0 %v507, 112
        %v529 = vpop.permute.xlu0 %528
        %530 = vrot.lane.b32.xlu0 %v508, 112
        %v531 = vpop.permute.xlu0 %530
        %532 = vrot.lane.b32.xlu0 %v509, 112
        %v533 = vpop.permute.xlu0 %532
        %v542 = vadd.f32 %v502, %v519
        %v543 = vadd.f32 %v503, %v521
        %v544 = vadd.f32 %v504, %v523
        %v545 = vadd.f32 %v505, %v525
        %v546 = vadd.f32 %v506, %v527
        %v547 = vadd.f32 %v507, %v529
        %v548 = vadd.f32 %v508, %v531
        %v549 = vadd.f32 %v509, %v533
        %v558 = vrot.slane %v543, 7
        %v559 = vsel %vm383, %v558, %v542
        %v560 = vrot.slane %v544, 6
        %v561 = vsel %vm386, %v560, %v559
        %v562 = vrot.slane %v545, 5
        %v563 = vsel %vm389, %v562, %v561
        %v564 = vrot.slane %v546, 4
        %v565 = vsel %vm392, %v564, %v563
        %v566 = vrot.slane %v547, 3
        %v567 = vsel %vm395, %v566, %v565
        %v568 = vrot.slane %v548, 2
        %v569 = vsel %vm398, %v568, %v567
        %v570 = vrot.slane %v549, 1
        %v571 = vsel %vm401, %v570, %v569
        %v572 = vsel %vm403, %v571, 0
        %574 = vmatprep.subr.mxu0 0.0
        %575 = vmatpush1.msra.mxu0 0.0
        %576 = vmatprep.subr.mxu0 0.0
        %577 = vmatpush1.msra.mxu0 0.0
        %578 = vmatprep.subr.mxu0 0.0
        %579 = vmatpush1.msra.mxu0 0.0
        %580 = vmatprep.subr.mxu0 0.0
        %581 = vmatpush1.msra.mxu0 0.0
        %582 = vmatprep.subr.mxu0 0.0
        %583 = vmatpush1.msra.mxu0 0.0
        %584 = vmatprep.subr.mxu0 0.0
        %585 = vmatpush1.msra.mxu0 0.0
        %586 = vmatprep.subr.mxu0 0.0
        %587 = vmatpush1.msra.mxu0 0.0
        %588 = vmatprep.subr.mxu0 0.0
        %589 = vmatpush1.msra.mxu0 0.0
        %590 = vmatprep.subr.mxu0 0.0
        %591 = vmatpush1.msra.mxu0 0.0
        %592 = vmatprep.subr.mxu0 0.0
        %593 = vmatpush1.msra.mxu0 0.0
        %594 = vmatprep.subr.mxu0 0.0
        %595 = vmatpush1.msra.mxu0 0.0
        %596 = vmatprep.subr.mxu0 0.0
        %597 = vmatpush1.msra.mxu0 0.0
        %598 = vmatprep.subr.mxu0 0.0
        %599 = vmatpush1.msra.mxu0 0.0
        %600 = vmatprep.subr.mxu0 0.0
        %601 = vmatpush1.msra.mxu0 0.0
        %602 = vmatprep.subr.mxu0 0.0
        %603 = vmatpush1.msra.mxu0 %v263
        %604 = vmatprep.subr.mxu0 0.0
        %605 = vmatpush1.msra.mxu0 %v262
        %606 = vmatprep.subr.mxu0 0.0
        %607 = vmatpush2.msra.mxu0 0.0
        %608 = vmatprep.subr.mxu0 0.0
        %609 = vmatpush2.msra.mxu0 0.0
        %610 = vmatprep.subr.mxu0 0.0
        %611 = vmatpush2.msra.mxu0 0.0
        %612 = vmatprep.subr.mxu0 0.0
        %613 = vmatpush2.msra.mxu0 0.0
        %614 = vmatprep.subr.mxu0 0.0
        %615 = vmatpush2.msra.mxu0 0.0
        %616 = vmatprep.subr.mxu0 0.0
        %617 = vmatpush2.msra.mxu0 0.0
        %618 = vmatprep.subr.mxu0 0.0
        %619 = vmatpush2.msra.mxu0 0.0
        %620 = vmatprep.subr.mxu0 0.0
        %621 = vmatpush2.msra.mxu0 0.0
        %622 = vmatprep.subr.mxu0 0.0
        %623 = vmatpush2.msra.mxu0 0.0
        %624 = vmatprep.subr.mxu0 0.0
        %625 = vmatpush2.msra.mxu0 0.0
        %626 = vmatprep.subr.mxu0 0.0
        %627 = vmatpush2.msra.mxu0 0.0
        %628 = vmatprep.subr.mxu0 0.0
        %629 = vmatpush2.msra.mxu0 0.0
        %630 = vmatprep.subr.mxu0 0.0
        %631 = vmatpush2.msra.mxu0 0.0
        %632 = vmatprep.subr.mxu0 0.0
        %633 = vmatpush2.msra.mxu0 0.0
        %634 = vmatprep.subr.mxu0 0.0
        %635 = vmatpush2.msra.mxu0 0.0
        %636 = vmatprep.subr.mxu0 0.0
        %637 = vmatpush2.msra.mxu0 0.0
        %638 = vmatprep.mubr.f32.mxu0 0.0
        %639 = vmatmul.mubr.f32.gmra.mxu0 %v572
        %v640 = vpop.f32.mrf.mxu0
        %v641 = vadd.f32 0.0, %v640
        %v642 = vpop.f32.mrf.mxu0
        %643 = vdwg.mxu0
        %645 = vrot.lane.b32.xlu0 %v641, 8
        %v646 = vpop.permute.xlu0 %645
        %vm648 = vcmask 130112
        %649 = vst.msk [vmem:[#allocation2] sm:$0xff] %vm648, %v646
        %v650 = vld [vmem:[%s233 + $0x2] sm:$0x1]
        %v651 = vld [vmem:[%s233 + $0xa] sm:$0x1]
        %v652 = vld [vmem:[%s233 + $0x12] sm:$0x1]
        %v653 = vld [vmem:[%s233 + $0x1a] sm:$0x1]
        %v654 = vld [vmem:[%s233 + $0x22] sm:$0x1]
        %v655 = vld [vmem:[%s233 + $0x2a] sm:$0x1]
        %v656 = vld [vmem:[%s233 + $0x32] sm:$0x1]
        %v657 = vld [vmem:[%s233 + $0x3a] sm:$0x1]
        %v658 = vmul.f32 %v650, %v275
        %v659 = vmul.f32 %v651, %v276
        %v660 = vmul.f32 %v652, %v277
        %v661 = vmul.f32 %v653, %v278
        %v662 = vmul.f32 %v654, %v279
        %v663 = vmul.f32 %v655, %v280
        %v664 = vmul.f32 %v656, %v281
        %v665 = vmul.f32 %v657, %v282
        %v666 = vadd.f32 %v658, %v302
        %v667 = vadd.f32 %v659, %v303
        %v668 = vadd.f32 %v660, %v304
        %v669 = vadd.f32 %v661, %v305
        %v670 = vadd.f32 %v662, %v306
        %v671 = vadd.f32 %v663, %v307
        %v672 = vadd.f32 %v664, %v308
        %v673 = vadd.f32 %v665, %v309
        %v674 = vmax.f32 %v666, 0.0
        %v675 = vmax.f32 %v667, 0.0
        %v676 = vmax.f32 %v668, 0.0
        %v677 = vmax.f32 %v669, 0.0
        %v678 = vmax.f32 %v670, 0.0
        %v679 = vmax.f32 %v671, 0.0
        %v680 = vmax.f32 %v672, 0.0
        %v681 = vmax.f32 %v673, 0.0
        %690 = vrot.lane.b32.xlu0 %v674, 112
        %v691 = vpop.permute.xlu0 %690
        %692 = vrot.lane.b32.xlu0 %v675, 112
        %v693 = vpop.permute.xlu0 %692
        %694 = vrot.lane.b32.xlu0 %v676, 112
        %v695 = vpop.permute.xlu0 %694
        %696 = vrot.lane.b32.xlu0 %v677, 112
        %v697 = vpop.permute.xlu0 %696
        %698 = vrot.lane.b32.xlu0 %v678, 112
        %v699 = vpop.permute.xlu0 %698
        %700 = vrot.lane.b32.xlu0 %v679, 112
        %v701 = vpop.permute.xlu0 %700
        %702 = vrot.lane.b32.xlu0 %v680, 112
        %v703 = vpop.permute.xlu0 %702
        %704 = vrot.lane.b32.xlu0 %v681, 112
        %v705 = vpop.permute.xlu0 %704
        %v714 = vadd.f32 %v674, %v691
        %v715 = vadd.f32 %v675, %v693
        %v716 = vadd.f32 %v676, %v695
        %v717 = vadd.f32 %v677, %v697
        %v718 = vadd.f32 %v678, %v699
        %v719 = vadd.f32 %v679, %v701
        %v720 = vadd.f32 %v680, %v703
        %v721 = vadd.f32 %v681, %v705
        %v730 = vrot.slane %v715, 7
        %v731 = vsel %vm383, %v730, %v714
        %v732 = vrot.slane %v716, 6
        %v733 = vsel %vm386, %v732, %v731
        %v734 = vrot.slane %v717, 5
        %v735 = vsel %vm389, %v734, %v733
        %v736 = vrot.slane %v718, 4
        %v737 = vsel %vm392, %v736, %v735
        %v738 = vrot.slane %v719, 3
        %v739 = vsel %vm395, %v738, %v737
        %v740 = vrot.slane %v720, 2
        %v741 = vsel %vm398, %v740, %v739
        %v742 = vrot.slane %v721, 1
        %v743 = vsel %vm401, %v742, %v741
        %v744 = vsel %vm403, %v743, 0
        %746 = vmatprep.subr.mxu0 0.0
        %747 = vmatpush1.msra.mxu0 0.0
        %748 = vmatprep.subr.mxu0 0.0
        %749 = vmatpush1.msra.mxu0 0.0
        %750 = vmatprep.subr.mxu0 0.0
        %751 = vmatpush1.msra.mxu0 0.0
        %752 = vmatprep.subr.mxu0 0.0
        %753 = vmatpush1.msra.mxu0 0.0
        %754 = vmatprep.subr.mxu0 0.0
        %755 = vmatpush1.msra.mxu0 0.0
        %756 = vmatprep.subr.mxu0 0.0
        %757 = vmatpush1.msra.mxu0 0.0
        %758 = vmatprep.subr.mxu0 0.0
        %759 = vmatpush1.msra.mxu0 0.0
        %760 = vmatprep.subr.mxu0 0.0
        %761 = vmatpush1.msra.mxu0 0.0
        %762 = vmatprep.subr.mxu0 0.0
        %763 = vmatpush1.msra.mxu0 0.0
        %764 = vmatprep.subr.mxu0 0.0
        %765 = vmatpush1.msra.mxu0 0.0
        %766 = vmatprep.subr.mxu0 0.0
        %767 = vmatpush1.msra.mxu0 0.0
        %768 = vmatprep.subr.mxu0 0.0
        %769 = vmatpush1.msra.mxu0 0.0
        %770 = vmatprep.subr.mxu0 0.0
        %771 = vmatpush1.msra.mxu0 0.0
        %772 = vmatprep.subr.mxu0 0.0
        %773 = vmatpush1.msra.mxu0 0.0
        %774 = vmatprep.subr.mxu0 0.0
        %775 = vmatpush1.msra.mxu0 %v263
        %776 = vmatprep.subr.mxu0 0.0
        %777 = vmatpush1.msra.mxu0 %v262
        %778 = vmatprep.subr.mxu0 0.0
        %779 = vmatpush2.msra.mxu0 0.0
        %780 = vmatprep.subr.mxu0 0.0
        %781 = vmatpush2.msra.mxu0 0.0
        %782 = vmatprep.subr.mxu0 0.0
        %783 = vmatpush2.msra.mxu0 0.0
        %784 = vmatprep.subr.mxu0 0.0
        %785 = vmatpush2.msra.mxu0 0.0
        %786 = vmatprep.subr.mxu0 0.0
        %787 = vmatpush2.msra.mxu0 0.0
        %788 = vmatprep.subr.mxu0 0.0
        %789 = vmatpush2.msra.mxu0 0.0
        %790 = vmatprep.subr.mxu0 0.0
        %791 = vmatpush2.msra.mxu0 0.0
        %792 = vmatprep.subr.mxu0 0.0
        %793 = vmatpush2.msra.mxu0 0.0
        %794 = vmatprep.subr.mxu0 0.0
        %795 = vmatpush2.msra.mxu0 0.0
        %796 = vmatprep.subr.mxu0 0.0
        %797 = vmatpush2.msra.mxu0 0.0
        %798 = vmatprep.subr.mxu0 0.0
        %799 = vmatpush2.msra.mxu0 0.0
        %800 = vmatprep.subr.mxu0 0.0
        %801 = vmatpush2.msra.mxu0 0.0
        %802 = vmatprep.subr.mxu0 0.0
        %803 = vmatpush2.msra.mxu0 0.0
        %804 = vmatprep.subr.mxu0 0.0
        %805 = vmatpush2.msra.mxu0 0.0
        %806 = vmatprep.subr.mxu0 0.0
        %807 = vmatpush2.msra.mxu0 0.0
        %808 = vmatprep.subr.mxu0 0.0
        %809 = vmatpush2.msra.mxu0 0.0
        %810 = vmatprep.mubr.f32.mxu0 0.0
        %811 = vmatmul.mubr.f32.gmra.mxu0 %v744
        %v812 = vpop.f32.mrf.mxu0
        %v813 = vadd.f32 0.0, %v812
        %v814 = vpop.f32.mrf.mxu0
        %815 = vdwg.mxu0
        %817 = vrot.lane.b32.xlu0 %v813, 16
        %v818 = vpop.permute.xlu0 %817
        %vm820 = vcmask 195712
        %821 = vst.msk [vmem:[#allocation2] sm:$0xff] %vm820, %v818
        %v822 = vld [vmem:[%s233 + $0x3] sm:$0x1]
        %v823 = vld [vmem:[%s233 + $0xb] sm:$0x1]
        %v824 = vld [vmem:[%s233 + $0x13] sm:$0x1]
        %v825 = vld [vmem:[%s233 + $0x1b] sm:$0x1]
        %v826 = vld [vmem:[%s233 + $0x23] sm:$0x1]
        %v827 = vld [vmem:[%s233 + $0x2b] sm:$0x1]
        %v828 = vld [vmem:[%s233 + $0x33] sm:$0x1]
        %v829 = vld [vmem:[%s233 + $0x3b] sm:$0x1]
        %v830 = vmul.f32 %v822, %v275
        %v831 = vmul.f32 %v823, %v276
        %v832 = vmul.f32 %v824, %v277
        %v833 = vmul.f32 %v825, %v278
        %v834 = vmul.f32 %v826, %v279
        %v835 = vmul.f32 %v827, %v280
        %v836 = vmul.f32 %v828, %v281
        %v837 = vmul.f32 %v829, %v282
        %v838 = vadd.f32 %v830, %v302
        %v839 = vadd.f32 %v831, %v303
        %v840 = vadd.f32 %v832, %v304
        %v841 = vadd.f32 %v833, %v305
        %v842 = vadd.f32 %v834, %v306
        %v843 = vadd.f32 %v835, %v307
        %v844 = vadd.f32 %v836, %v308
        %v845 = vadd.f32 %v837, %v309
        %v846 = vmax.f32 %v838, 0.0
        %v847 = vmax.f32 %v839, 0.0
        %v848 = vmax.f32 %v840, 0.0
        %v849 = vmax.f32 %v841, 0.0
        %v850 = vmax.f32 %v842, 0.0
        %v851 = vmax.f32 %v843, 0.0
        %v852 = vmax.f32 %v844, 0.0
        %v853 = vmax.f32 %v845, 0.0
        %862 = vrot.lane.b32.xlu0 %v846, 112
        %v863 = vpop.permute.xlu0 %862
        %864 = vrot.lane.b32.xlu0 %v847, 112
        %v865 = vpop.permute.xlu0 %864
        %866 = vrot.lane.b32.xlu0 %v848, 112
        %v867 = vpop.permute.xlu0 %866
        %868 = vrot.lane.b32.xlu0 %v849, 112
        %v869 = vpop.permute.xlu0 %868
        %870 = vrot.lane.b32.xlu0 %v850, 112
        %v871 = vpop.permute.xlu0 %870
        %872 = vrot.lane.b32.xlu0 %v851, 112
        %v873 = vpop.permute.xlu0 %872
        %874 = vrot.lane.b32.xlu0 %v852, 112
        %v875 = vpop.permute.xlu0 %874
        %876 = vrot.lane.b32.xlu0 %v853, 112
        %v877 = vpop.permute.xlu0 %876
        %v886 = vadd.f32 %v846, %v863
        %v887 = vadd.f32 %v847, %v865
        %v888 = vadd.f32 %v848, %v867
        %v889 = vadd.f32 %v849, %v869
        %v890 = vadd.f32 %v850, %v871
        %v891 = vadd.f32 %v851, %v873
        %v892 = vadd.f32 %v852, %v875
        %v893 = vadd.f32 %v853, %v877
        %v902 = vrot.slane %v887, 7
        %v903 = vsel %vm383, %v902, %v886
        %v904 = vrot.slane %v888, 6
        %v905 = vsel %vm386, %v904, %v903
        %v906 = vrot.slane %v889, 5
        %v907 = vsel %vm389, %v906, %v905
        %v908 = vrot.slane %v890, 4
        %v909 = vsel %vm392, %v908, %v907
        %v910 = vrot.slane %v891, 3
        %v911 = vsel %vm395, %v910, %v909
        %v912 = vrot.slane %v892, 2
        %v913 = vsel %vm398, %v912, %v911
        %v914 = vrot.slane %v893, 1
        %v915 = vsel %vm401, %v914, %v913
        %v916 = vsel %vm403, %v915, 0
        %918 = vmatprep.subr.mxu0 0.0
        %919 = vmatpush1.msra.mxu0 0.0
        %920 = vmatprep.subr.mxu0 0.0
        %921 = vmatpush1.msra.mxu0 0.0
        %922 = vmatprep.subr.mxu0 0.0
        %923 = vmatpush1.msra.mxu0 0.0
        %924 = vmatprep.subr.mxu0 0.0
        %925 = vmatpush1.msra.mxu0 0.0
        %926 = vmatprep.subr.mxu0 0.0
        %927 = vmatpush1.msra.mxu0 0.0
        %928 = vmatprep.subr.mxu0 0.0
        %929 = vmatpush1.msra.mxu0 0.0
        %930 = vmatprep.subr.mxu0 0.0
        %931 = vmatpush1.msra.mxu0 0.0
        %932 = vmatprep.subr.mxu0 0.0
        %933 = vmatpush1.msra.mxu0 0.0
        %934 = vmatprep.subr.mxu0 0.0
        %935 = vmatpush1.msra.mxu0 0.0
        %936 = vmatprep.subr.mxu0 0.0
        %937 = vmatpush1.msra.mxu0 0.0
        %938 = vmatprep.subr.mxu0 0.0
        %939 = vmatpush1.msra.mxu0 0.0
        %940 = vmatprep.subr.mxu0 0.0
        %941 = vmatpush1.msra.mxu0 0.0
        %942 = vmatprep.subr.mxu0 0.0
        %943 = vmatpush1.msra.mxu0 0.0
        %944 = vmatprep.subr.mxu0 0.0
        %945 = vmatpush1.msra.mxu0 0.0
        %946 = vmatprep.subr.mxu0 0.0
        %947 = vmatpush1.msra.mxu0 %v263
        %948 = vmatprep.subr.mxu0 0.0
        %949 = vmatpush1.msra.mxu0 %v262
        %950 = vmatprep.subr.mxu0 0.0
        %951 = vmatpush2.msra.mxu0 0.0
        %952 = vmatprep.subr.mxu0 0.0
        %953 = vmatpush2.msra.mxu0 0.0
        %954 = vmatprep.subr.mxu0 0.0
        %955 = vmatpush2.msra.mxu0 0.0
        %956 = vmatprep.subr.mxu0 0.0
        %957 = vmatpush2.msra.mxu0 0.0
        %958 = vmatprep.subr.mxu0 0.0
        %959 = vmatpush2.msra.mxu0 0.0
        %960 = vmatprep.subr.mxu0 0.0
        %961 = vmatpush2.msra.mxu0 0.0
        %962 = vmatprep.subr.mxu0 0.0
        %963 = vmatpush2.msra.mxu0 0.0
        %964 = vmatprep.subr.mxu0 0.0
        %965 = vmatpush2.msra.mxu0 0.0
        %966 = vmatprep.subr.mxu0 0.0
        %967 = vmatpush2.msra.mxu0 0.0
        %968 = vmatprep.subr.mxu0 0.0
        %969 = vmatpush2.msra.mxu0 0.0
        %970 = vmatprep.subr.mxu0 0.0
        %971 = vmatpush2.msra.mxu0 0.0
        %972 = vmatprep.subr.mxu0 0.0
        %973 = vmatpush2.msra.mxu0 0.0
        %974 = vmatprep.subr.mxu0 0.0
        %975 = vmatpush2.msra.mxu0 0.0
        %976 = vmatprep.subr.mxu0 0.0
        %977 = vmatpush2.msra.mxu0 0.0
        %978 = vmatprep.subr.mxu0 0.0
        %979 = vmatpush2.msra.mxu0 0.0
        %980 = vmatprep.subr.mxu0 0.0
        %981 = vmatpush2.msra.mxu0 0.0
        %982 = vmatprep.mubr.f32.mxu0 0.0
        %983 = vmatmul.mubr.f32.gmra.mxu0 %v916
        %v984 = vpop.f32.mrf.mxu0
        %v985 = vadd.f32 0.0, %v984
        %v986 = vpop.f32.mrf.mxu0
        %987 = vdwg.mxu0
        %989 = vrot.lane.b32.xlu0 %v985, 24
        %v990 = vpop.permute.xlu0 %989
        %vm992 = vcmask 261312
        %993 = vst.msk [vmem:[#allocation2] sm:$0xff] %vm992, %v990
        %v994 = vld [vmem:[%s233 + $0x4] sm:$0x1]
        %v995 = vld [vmem:[%s233 + $0xc] sm:$0x1]
        %v996 = vld [vmem:[%s233 + $0x14] sm:$0x1]
        %v997 = vld [vmem:[%s233 + $0x1c] sm:$0x1]
        %v998 = vld [vmem:[%s233 + $0x24] sm:$0x1]
        %v999 = vld [vmem:[%s233 + $0x2c] sm:$0x1]
        %v1000 = vld [vmem:[%s233 + $0x34] sm:$0x1]
        %v1001 = vld [vmem:[%s233 + $0x3c] sm:$0x1]
        %v1002 = vmul.f32 %v994, %v275
        %v1003 = vmul.f32 %v995, %v276
        %v1004 = vmul.f32 %v996, %v277
        %v1005 = vmul.f32 %v997, %v278
        %v1006 = vmul.f32 %v998, %v279
        %v1007 = vmul.f32 %v999, %v280
        %v1008 = vmul.f32 %v1000, %v281
        %v1009 = vmul.f32 %v1001, %v282
        %v1010 = vadd.f32 %v1002, %v302
        %v1011 = vadd.f32 %v1003, %v303
        %v1012 = vadd.f32 %v1004, %v304
        %v1013 = vadd.f32 %v1005, %v305
        %v1014 = vadd.f32 %v1006, %v306
        %v1015 = vadd.f32 %v1007, %v307
        %v1016 = vadd.f32 %v1008, %v308
        %v1017 = vadd.f32 %v1009, %v309
        %v1018 = vmax.f32 %v1010, 0.0
        %v1019 = vmax.f32 %v1011, 0.0
        %v1020 = vmax.f32 %v1012, 0.0
        %v1021 = vmax.f32 %v1013, 0.0
        %v1022 = vmax.f32 %v1014, 0.0
        %v1023 = vmax.f32 %v1015, 0.0
        %v1024 = vmax.f32 %v1016, 0.0
        %v1025 = vmax.f32 %v1017, 0.0
        %1034 = vrot.lane.b32.xlu0 %v1018, 112
        %v1035 = vpop.permute.xlu0 %1034
        %1036 = vrot.lane.b32.xlu0 %v1019, 112
        %v1037 = vpop.permute.xlu0 %1036
        %1038 = vrot.lane.b32.xlu0 %v1020, 112
        %v1039 = vpop.permute.xlu0 %1038
        %1040 = vrot.lane.b32.xlu0 %v1021, 112
        %v1041 = vpop.permute.xlu0 %1040
        %1042 = vrot.lane.b32.xlu0 %v1022, 112
        %v1043 = vpop.permute.xlu0 %1042
        %1044 = vrot.lane.b32.xlu0 %v1023, 112
        %v1045 = vpop.permute.xlu0 %1044
        %1046 = vrot.lane.b32.xlu0 %v1024, 112
        %v1047 = vpop.permute.xlu0 %1046
        %1048 = vrot.lane.b32.xlu0 %v1025, 112
        %v1049 = vpop.permute.xlu0 %1048
        %v1058 = vadd.f32 %v1018, %v1035
        %v1059 = vadd.f32 %v1019, %v1037
        %v1060 = vadd.f32 %v1020, %v1039
        %v1061 = vadd.f32 %v1021, %v1041
        %v1062 = vadd.f32 %v1022, %v1043
        %v1063 = vadd.f32 %v1023, %v1045
        %v1064 = vadd.f32 %v1024, %v1047
        %v1065 = vadd.f32 %v1025, %v1049
        %v1074 = vrot.slane %v1059, 7
        %v1075 = vsel %vm383, %v1074, %v1058
        %v1076 = vrot.slane %v1060, 6
        %v1077 = vsel %vm386, %v1076, %v1075
        %v1078 = vrot.slane %v1061, 5
        %v1079 = vsel %vm389, %v1078, %v1077
        %v1080 = vrot.slane %v1062, 4
        %v1081 = vsel %vm392, %v1080, %v1079
        %v1082 = vrot.slane %v1063, 3
        %v1083 = vsel %vm395, %v1082, %v1081
        %v1084 = vrot.slane %v1064, 2
        %v1085 = vsel %vm398, %v1084, %v1083
        %v1086 = vrot.slane %v1065, 1
        %v1087 = vsel %vm401, %v1086, %v1085
        %v1088 = vsel %vm403, %v1087, 0
        %1090 = vmatprep.subr.mxu0 0.0
        %1091 = vmatpush1.msra.mxu0 0.0
        %1092 = vmatprep.subr.mxu0 0.0
        %1093 = vmatpush1.msra.mxu0 0.0
        %1094 = vmatprep.subr.mxu0 0.0
        %1095 = vmatpush1.msra.mxu0 0.0
        %1096 = vmatprep.subr.mxu0 0.0
        %1097 = vmatpush1.msra.mxu0 0.0
        %1098 = vmatprep.subr.mxu0 0.0
        %1099 = vmatpush1.msra.mxu0 0.0
        %1100 = vmatprep.subr.mxu0 0.0
        %1101 = vmatpush1.msra.mxu0 0.0
        %1102 = vmatprep.subr.mxu0 0.0
        %1103 = vmatpush1.msra.mxu0 0.0
        %1104 = vmatprep.subr.mxu0 0.0
        %1105 = vmatpush1.msra.mxu0 0.0
        %1106 = vmatprep.subr.mxu0 0.0
        %1107 = vmatpush1.msra.mxu0 0.0
        %1108 = vmatprep.subr.mxu0 0.0
        %1109 = vmatpush1.msra.mxu0 0.0
        %1110 = vmatprep.subr.mxu0 0.0
        %1111 = vmatpush1.msra.mxu0 0.0
        %1112 = vmatprep.subr.mxu0 0.0
        %1113 = vmatpush1.msra.mxu0 0.0
        %1114 = vmatprep.subr.mxu0 0.0
        %1115 = vmatpush1.msra.mxu0 0.0
        %1116 = vmatprep.subr.mxu0 0.0
        %1117 = vmatpush1.msra.mxu0 0.0
        %1118 = vmatprep.subr.mxu0 0.0
        %1119 = vmatpush1.msra.mxu0 %v263
        %1120 = vmatprep.subr.mxu0 0.0
        %1121 = vmatpush1.msra.mxu0 %v262
        %1122 = vmatprep.subr.mxu0 0.0
        %1123 = vmatpush2.msra.mxu0 0.0
        %1124 = vmatprep.subr.mxu0 0.0
        %1125 = vmatpush2.msra.mxu0 0.0
        %1126 = vmatprep.subr.mxu0 0.0
        %1127 = vmatpush2.msra.mxu0 0.0
        %1128 = vmatprep.subr.mxu0 0.0
        %1129 = vmatpush2.msra.mxu0 0.0
        %1130 = vmatprep.subr.mxu0 0.0
        %1131 = vmatpush2.msra.mxu0 0.0
        %1132 = vmatprep.subr.mxu0 0.0
        %1133 = vmatpush2.msra.mxu0 0.0
        %1134 = vmatprep.subr.mxu0 0.0
        %1135 = vmatpush2.msra.mxu0 0.0
        %1136 = vmatprep.subr.mxu0 0.0
        %1137 = vmatpush2.msra.mxu0 0.0
        %1138 = vmatprep.subr.mxu0 0.0
        %1139 = vmatpush2.msra.mxu0 0.0
        %1140 = vmatprep.subr.mxu0 0.0
        %1141 = vmatpush2.msra.mxu0 0.0
        %1142 = vmatprep.subr.mxu0 0.0
        %1143 = vmatpush2.msra.mxu0 0.0
        %1144 = vmatprep.subr.mxu0 0.0
        %1145 = vmatpush2.msra.mxu0 0.0
        %1146 = vmatprep.subr.mxu0 0.0
        %1147 = vmatpush2.msra.mxu0 0.0
        %1148 = vmatprep.subr.mxu0 0.0
        %1149 = vmatpush2.msra.mxu0 0.0
        %1150 = vmatprep.subr.mxu0 0.0
        %1151 = vmatpush2.msra.mxu0 0.0
        %1152 = vmatprep.subr.mxu0 0.0
        %1153 = vmatpush2.msra.mxu0 0.0
        %1154 = vmatprep.mubr.f32.mxu0 0.0
        %1155 = vmatmul.mubr.f32.gmra.mxu0 %v1088
        %v1156 = vpop.f32.mrf.mxu0
        %v1157 = vadd.f32 0.0, %v1156
        %v1158 = vpop.f32.mrf.mxu0
        %1159 = vdwg.mxu0
        %1161 = vrot.lane.b32.xlu0 %v1157, 32
        %v1162 = vpop.permute.xlu0 %1161
        %vm1164 = vcmask 326912
        %1165 = vst.msk [vmem:[#allocation2] sm:$0xff] %vm1164, %v1162
        %v1166 = vld [vmem:[%s233 + $0x5] sm:$0x1]
        %v1167 = vld [vmem:[%s233 + $0xd] sm:$0x1]
        %v1168 = vld [vmem:[%s233 + $0x15] sm:$0x1]
        %v1169 = vld [vmem:[%s233 + $0x1d] sm:$0x1]
        %v1170 = vld [vmem:[%s233 + $0x25] sm:$0x1]
        %v1171 = vld [vmem:[%s233 + $0x2d] sm:$0x1]
        %v1172 = vld [vmem:[%s233 + $0x35] sm:$0x1]
        %v1173 = vld [vmem:[%s233 + $0x3d] sm:$0x1]
        %v1174 = vmul.f32 %v1166, %v275
        %v1175 = vmul.f32 %v1167, %v276
        %v1176 = vmul.f32 %v1168, %v277
        %v1177 = vmul.f32 %v1169, %v278
        %v1178 = vmul.f32 %v1170, %v279
        %v1179 = vmul.f32 %v1171, %v280
        %v1180 = vmul.f32 %v1172, %v281
        %v1181 = vmul.f32 %v1173, %v282
        %v1182 = vadd.f32 %v1174, %v302
        %v1183 = vadd.f32 %v1175, %v303
        %v1184 = vadd.f32 %v1176, %v304
        %v1185 = vadd.f32 %v1177, %v305
        %v1186 = vadd.f32 %v1178, %v306
        %v1187 = vadd.f32 %v1179, %v307
        %v1188 = vadd.f32 %v1180, %v308
        %v1189 = vadd.f32 %v1181, %v309
        %v1190 = vmax.f32 %v1182, 0.0
        %v1191 = vmax.f32 %v1183, 0.0
        %v1192 = vmax.f32 %v1184, 0.0
        %v1193 = vmax.f32 %v1185, 0.0
        %v1194 = vmax.f32 %v1186, 0.0
        %v1195 = vmax.f32 %v1187, 0.0
        %v1196 = vmax.f32 %v1188, 0.0
        %v1197 = vmax.f32 %v1189, 0.0
        %1206 = vrot.lane.b32.xlu0 %v1190, 112
        %v1207 = vpop.permute.xlu0 %1206
        %1208 = vrot.lane.b32.xlu0 %v1191, 112
        %v1209 = vpop.permute.xlu0 %1208
        %1210 = vrot.lane.b32.xlu0 %v1192, 112
        %v1211 = vpop.permute.xlu0 %1210
        %1212 = vrot.lane.b32.xlu0 %v1193, 112
        %v1213 = vpop.permute.xlu0 %1212
        %1214 = vrot.lane.b32.xlu0 %v1194, 112
        %v1215 = vpop.permute.xlu0 %1214
        %1216 = vrot.lane.b32.xlu0 %v1195, 112
        %v1217 = vpop.permute.xlu0 %1216
        %1218 = vrot.lane.b32.xlu0 %v1196, 112
        %v1219 = vpop.permute.xlu0 %1218
        %1220 = vrot.lane.b32.xlu0 %v1197, 112
        %v1221 = vpop.permute.xlu0 %1220
        %v1230 = vadd.f32 %v1190, %v1207
        %v1231 = vadd.f32 %v1191, %v1209
        %v1232 = vadd.f32 %v1192, %v1211
        %v1233 = vadd.f32 %v1193, %v1213
        %v1234 = vadd.f32 %v1194, %v1215
        %v1235 = vadd.f32 %v1195, %v1217
        %v1236 = vadd.f32 %v1196, %v1219
        %v1237 = vadd.f32 %v1197, %v1221
        %v1246 = vrot.slane %v1231, 7
        %v1247 = vsel %vm383, %v1246, %v1230
        %v1248 = vrot.slane %v1232, 6
        %v1249 = vsel %vm386, %v1248, %v1247
        %v1250 = vrot.slane %v1233, 5
        %v1251 = vsel %vm389, %v1250, %v1249
        %v1252 = vrot.slane %v1234, 4
        %v1253 = vsel %vm392, %v1252, %v1251
        %v1254 = vrot.slane %v1235, 3
        %v1255 = vsel %vm395, %v1254, %v1253
        %v1256 = vrot.slane %v1236, 2
        %v1257 = vsel %vm398, %v1256, %v1255
        %v1258 = vrot.slane %v1237, 1
        %v1259 = vsel %vm401, %v1258, %v1257
        %v1260 = vsel %vm403, %v1259, 0
        %1262 = vmatprep.subr.mxu0 0.0
        %1263 = vmatpush1.msra.mxu0 0.0
        %1264 = vmatprep.subr.mxu0 0.0
        %1265 = vmatpush1.msra.mxu0 0.0
        %1266 = vmatprep.subr.mxu0 0.0
        %1267 = vmatpush1.msra.mxu0 0.0
        %1268 = vmatprep.subr.mxu0 0.0
        %1269 = vmatpush1.msra.mxu0 0.0
        %1270 = vmatprep.subr.mxu0 0.0
        %1271 = vmatpush1.msra.mxu0 0.0
        %1272 = vmatprep.subr.mxu0 0.0
        %1273 = vmatpush1.msra.mxu0 0.0
        %1274 = vmatprep.subr.mxu0 0.0
        %1275 = vmatpush1.msra.mxu0 0.0
        %1276 = vmatprep.subr.mxu0 0.0
        %1277 = vmatpush1.msra.mxu0 0.0
        %1278 = vmatprep.subr.mxu0 0.0
        %1279 = vmatpush1.msra.mxu0 0.0
        %1280 = vmatprep.subr.mxu0 0.0
        %1281 = vmatpush1.msra.mxu0 0.0
        %1282 = vmatprep.subr.mxu0 0.0
        %1283 = vmatpush1.msra.mxu0 0.0
        %1284 = vmatprep.subr.mxu0 0.0
        %1285 = vmatpush1.msra.mxu0 0.0
        %1286 = vmatprep.subr.mxu0 0.0
        %1287 = vmatpush1.msra.mxu0 0.0
        %1288 = vmatprep.subr.mxu0 0.0
        %1289 = vmatpush1.msra.mxu0 0.0
        %1290 = vmatprep.subr.mxu0 0.0
        %1291 = vmatpush1.msra.mxu0 %v263
        %1292 = vmatprep.subr.mxu0 0.0
        %1293 = vmatpush1.msra.mxu0 %v262
        %1294 = vmatprep.subr.mxu0 0.0
        %1295 = vmatpush2.msra.mxu0 0.0
        %1296 = vmatprep.subr.mxu0 0.0
        %1297 = vmatpush2.msra.mxu0 0.0
        %1298 = vmatprep.subr.mxu0 0.0
        %1299 = vmatpush2.msra.mxu0 0.0
        %1300 = vmatprep.subr.mxu0 0.0
        %1301 = vmatpush2.msra.mxu0 0.0
        %1302 = vmatprep.subr.mxu0 0.0
        %1303 = vmatpush2.msra.mxu0 0.0
        %1304 = vmatprep.subr.mxu0 0.0
        %1305 = vmatpush2.msra.mxu0 0.0
        %1306 = vmatprep.subr.mxu0 0.0
        %1307 = vmatpush2.msra.mxu0 0.0
        %1308 = vmatprep.subr.mxu0 0.0
        %1309 = vmatpush2.msra.mxu0 0.0
        %1310 = vmatprep.subr.mxu0 0.0
        %1311 = vmatpush2.msra.mxu0 0.0
        %1312 = vmatprep.subr.mxu0 0.0
        %1313 = vmatpush2.msra.mxu0 0.0
        %1314 = vmatprep.subr.mxu0 0.0
        %1315 = vmatpush2.msra.mxu0 0.0
        %1316 = vmatprep.subr.mxu0 0.0
        %1317 = vmatpush2.msra.mxu0 0.0
        %1318 = vmatprep.subr.mxu0 0.0
        %1319 = vmatpush2.msra.mxu0 0.0
        %1320 = vmatprep.subr.mxu0 0.0
        %1321 = vmatpush2.msra.mxu0 0.0
        %1322 = vmatprep.subr.mxu0 0.0
        %1323 = vmatpush2.msra.mxu0 0.0
        %1324 = vmatprep.subr.mxu0 0.0
        %1325 = vmatpush2.msra.mxu0 0.0
        %1326 = vmatprep.mubr.f32.mxu0 0.0
        %1327 = vmatmul.mubr.f32.gmra.mxu0 %v1260
        %v1328 = vpop.f32.mrf.mxu0
        %v1329 = vadd.f32 0.0, %v1328
        %v1330 = vpop.f32.mrf.mxu0
        %1331 = vdwg.mxu0
        %1333 = vrot.lane.b32.xlu0 %v1329, 40
        %v1334 = vpop.permute.xlu0 %1333
        %vm1336 = vcmask 392512
        %1337 = vst.msk [vmem:[#allocation2] sm:$0xff] %vm1336, %v1334
        %v1338 = vld [vmem:[%s233 + $0x6] sm:$0x1]
        %v1339 = vld [vmem:[%s233 + $0xe] sm:$0x1]
        %v1340 = vld [vmem:[%s233 + $0x16] sm:$0x1]
        %v1341 = vld [vmem:[%s233 + $0x1e] sm:$0x1]
        %v1342 = vld [vmem:[%s233 + $0x26] sm:$0x1]
        %v1343 = vld [vmem:[%s233 + $0x2e] sm:$0x1]
        %v1344 = vld [vmem:[%s233 + $0x36] sm:$0x1]
        %v1345 = vld [vmem:[%s233 + $0x3e] sm:$0x1]
        %v1346 = vmul.f32 %v1338, %v275
        %v1347 = vmul.f32 %v1339, %v276
        %v1348 = vmul.f32 %v1340, %v277
        %v1349 = vmul.f32 %v1341, %v278
        %v1350 = vmul.f32 %v1342, %v279
        %v1351 = vmul.f32 %v1343, %v280
        %v1352 = vmul.f32 %v1344, %v281
        %v1353 = vmul.f32 %v1345, %v282
        %v1354 = vadd.f32 %v1346, %v302
        %v1355 = vadd.f32 %v1347, %v303
        %v1356 = vadd.f32 %v1348, %v304
        %v1357 = vadd.f32 %v1349, %v305
        %v1358 = vadd.f32 %v1350, %v306
        %v1359 = vadd.f32 %v1351, %v307
        %v1360 = vadd.f32 %v1352, %v308
        %v1361 = vadd.f32 %v1353, %v309
        %v1362 = vmax.f32 %v1354, 0.0
        %v1363 = vmax.f32 %v1355, 0.0
        %v1364 = vmax.f32 %v1356, 0.0
        %v1365 = vmax.f32 %v1357, 0.0
        %v1366 = vmax.f32 %v1358, 0.0
        %v1367 = vmax.f32 %v1359, 0.0
        %v1368 = vmax.f32 %v1360, 0.0
        %v1369 = vmax.f32 %v1361, 0.0
        %1378 = vrot.lane.b32.xlu0 %v1362, 112
        %v1379 = vpop.permute.xlu0 %1378
        %1380 = vrot.lane.b32.xlu0 %v1363, 112
        %v1381 = vpop.permute.xlu0 %1380
        %1382 = vrot.lane.b32.xlu0 %v1364, 112
        %v1383 = vpop.permute.xlu0 %1382
        %1384 = vrot.lane.b32.xlu0 %v1365, 112
        %v1385 = vpop.permute.xlu0 %1384
        %1386 = vrot.lane.b32.xlu0 %v1366, 112
        %v1387 = vpop.permute.xlu0 %1386
        %1388 = vrot.lane.b32.xlu0 %v1367, 112
        %v1389 = vpop.permute.xlu0 %1388
        %1390 = vrot.lane.b32.xlu0 %v1368, 112
        %v1391 = vpop.permute.xlu0 %1390
        %1392 = vrot.lane.b32.xlu0 %v1369, 112
        %v1393 = vpop.permute.xlu0 %1392
        %v1402 = vadd.f32 %v1362, %v1379
        %v1403 = vadd.f32 %v1363, %v1381
        %v1404 = vadd.f32 %v1364, %v1383
        %v1405 = vadd.f32 %v1365, %v1385
        %v1406 = vadd.f32 %v1366, %v1387
        %v1407 = vadd.f32 %v1367, %v1389
        %v1408 = vadd.f32 %v1368, %v1391
        %v1409 = vadd.f32 %v1369, %v1393
        %v1418 = vrot.slane %v1403, 7
        %v1419 = vsel %vm383, %v1418, %v1402
        %v1420 = vrot.slane %v1404, 6
        %v1421 = vsel %vm386, %v1420, %v1419
        %v1422 = vrot.slane %v1405, 5
        %v1423 = vsel %vm389, %v1422, %v1421
        %v1424 = vrot.slane %v1406, 4
        %v1425 = vsel %vm392, %v1424, %v1423
        %v1426 = vrot.slane %v1407, 3
        %v1427 = vsel %vm395, %v1426, %v1425
        %v1428 = vrot.slane %v1408, 2
        %v1429 = vsel %vm398, %v1428, %v1427
        %v1430 = vrot.slane %v1409, 1
        %v1431 = vsel %vm401, %v1430, %v1429
        %v1432 = vsel %vm403, %v1431, 0
        %1434 = vmatprep.subr.mxu0 0.0
        %1435 = vmatpush1.msra.mxu0 0.0
        %1436 = vmatprep.subr.mxu0 0.0
        %1437 = vmatpush1.msra.mxu0 0.0
        %1438 = vmatprep.subr.mxu0 0.0
        %1439 = vmatpush1.msra.mxu0 0.0
        %1440 = vmatprep.subr.mxu0 0.0
        %1441 = vmatpush1.msra.mxu0 0.0
        %1442 = vmatprep.subr.mxu0 0.0
        %1443 = vmatpush1.msra.mxu0 0.0
        %1444 = vmatprep.subr.mxu0 0.0
        %1445 = vmatpush1.msra.mxu0 0.0
        %1446 = vmatprep.subr.mxu0 0.0
        %1447 = vmatpush1.msra.mxu0 0.0
        %1448 = vmatprep.subr.mxu0 0.0
        %1449 = vmatpush1.msra.mxu0 0.0
        %1450 = vmatprep.subr.mxu0 0.0
        %1451 = vmatpush1.msra.mxu0 0.0
        %1452 = vmatprep.subr.mxu0 0.0
        %1453 = vmatpush1.msra.mxu0 0.0
        %1454 = vmatprep.subr.mxu0 0.0
        %1455 = vmatpush1.msra.mxu0 0.0
        %1456 = vmatprep.subr.mxu0 0.0
        %1457 = vmatpush1.msra.mxu0 0.0
        %1458 = vmatprep.subr.mxu0 0.0
        %1459 = vmatpush1.msra.mxu0 0.0
        %1460 = vmatprep.subr.mxu0 0.0
        %1461 = vmatpush1.msra.mxu0 0.0
        %1462 = vmatprep.subr.mxu0 0.0
        %1463 = vmatpush1.msra.mxu0 %v263
        %1464 = vmatprep.subr.mxu0 0.0
        %1465 = vmatpush1.msra.mxu0 %v262
        %1466 = vmatprep.subr.mxu0 0.0
        %1467 = vmatpush2.msra.mxu0 0.0
        %1468 = vmatprep.subr.mxu0 0.0
        %1469 = vmatpush2.msra.mxu0 0.0
        %1470 = vmatprep.subr.mxu0 0.0
        %1471 = vmatpush2.msra.mxu0 0.0
        %1472 = vmatprep.subr.mxu0 0.0
        %1473 = vmatpush2.msra.mxu0 0.0
        %1474 = vmatprep.subr.mxu0 0.0
        %1475 = vmatpush2.msra.mxu0 0.0
        %1476 = vmatprep.subr.mxu0 0.0
        %1477 = vmatpush2.msra.mxu0 0.0
        %1478 = vmatprep.subr.mxu0 0.0
        %1479 = vmatpush2.msra.mxu0 0.0
        %1480 = vmatprep.subr.mxu0 0.0
        %1481 = vmatpush2.msra.mxu0 0.0
        %1482 = vmatprep.subr.mxu0 0.0
        %1483 = vmatpush2.msra.mxu0 0.0
        %1484 = vmatprep.subr.mxu0 0.0
        %1485 = vmatpush2.msra.mxu0 0.0
        %1486 = vmatprep.subr.mxu0 0.0
        %1487 = vmatpush2.msra.mxu0 0.0
        %1488 = vmatprep.subr.mxu0 0.0
        %1489 = vmatpush2.msra.mxu0 0.0
        %1490 = vmatprep.subr.mxu0 0.0
        %1491 = vmatpush2.msra.mxu0 0.0
        %1492 = vmatprep.subr.mxu0 0.0
        %1493 = vmatpush2.msra.mxu0 0.0
        %1494 = vmatprep.subr.mxu0 0.0
        %1495 = vmatpush2.msra.mxu0 0.0
        %1496 = vmatprep.subr.mxu0 0.0
        %1497 = vmatpush2.msra.mxu0 0.0
        %1498 = vmatprep.mubr.f32.mxu0 0.0
        %1499 = vmatmul.mubr.f32.gmra.mxu0 %v1432
        %v1500 = vpop.f32.mrf.mxu0
        %v1501 = vadd.f32 0.0, %v1500
        %v1502 = vpop.f32.mrf.mxu0
        %1503 = vdwg.mxu0
        %1505 = vrot.lane.b32.xlu0 %v1501, 48
        %v1506 = vpop.permute.xlu0 %1505
        %vm1508 = vcmask 458112
        %1509 = vst.msk [vmem:[#allocation2] sm:$0xff] %vm1508, %v1506
        %v1510 = vld [vmem:[%s233 + $0x7] sm:$0x1]
        %v1511 = vld [vmem:[%s233 + $0xf] sm:$0x1]
        %v1512 = vld [vmem:[%s233 + $0x17] sm:$0x1]
        %v1513 = vld [vmem:[%s233 + $0x1f] sm:$0x1]
        %v1514 = vld [vmem:[%s233 + $0x27] sm:$0x1]
        %v1515 = vld [vmem:[%s233 + $0x2f] sm:$0x1]
        %v1516 = vld [vmem:[%s233 + $0x37] sm:$0x1]
        %v1517 = vld [vmem:[%s233 + $0x3f] sm:$0x1]
        %v1518 = vmul.f32 %v1510, %v275
        %v1519 = vmul.f32 %v1511, %v276
        %v1520 = vmul.f32 %v1512, %v277
        %v1521 = vmul.f32 %v1513, %v278
        %v1522 = vmul.f32 %v1514, %v279
        %v1523 = vmul.f32 %v1515, %v280
        %v1524 = vmul.f32 %v1516, %v281
        %v1525 = vmul.f32 %v1517, %v282
        %v1526 = vadd.f32 %v1518, %v302
        %v1527 = vadd.f32 %v1519, %v303
        %v1528 = vadd.f32 %v1520, %v304
        %v1529 = vadd.f32 %v1521, %v305
        %v1530 = vadd.f32 %v1522, %v306
        %v1531 = vadd.f32 %v1523, %v307
        %v1532 = vadd.f32 %v1524, %v308
        %v1533 = vadd.f32 %v1525, %v309
        %v1534 = vmax.f32 %v1526, 0.0
        %v1535 = vmax.f32 %v1527, 0.0
        %v1536 = vmax.f32 %v1528, 0.0
        %v1537 = vmax.f32 %v1529, 0.0
        %v1538 = vmax.f32 %v1530, 0.0
        %v1539 = vmax.f32 %v1531, 0.0
        %v1540 = vmax.f32 %v1532, 0.0
        %v1541 = vmax.f32 %v1533, 0.0
        %1550 = vrot.lane.b32.xlu0 %v1534, 112
        %v1551 = vpop.permute.xlu0 %1550
        %1552 = vrot.lane.b32.xlu0 %v1535, 112
        %v1553 = vpop.permute.xlu0 %1552
        %1554 = vrot.lane.b32.xlu0 %v1536, 112
        %v1555 = vpop.permute.xlu0 %1554
        %1556 = vrot.lane.b32.xlu0 %v1537, 112
        %v1557 = vpop.permute.xlu0 %1556
        %1558 = vrot.lane.b32.xlu0 %v1538, 112
        %v1559 = vpop.permute.xlu0 %1558
        %1560 = vrot.lane.b32.xlu0 %v1539, 112
        %v1561 = vpop.permute.xlu0 %1560
        %1562 = vrot.lane.b32.xlu0 %v1540, 112
        %v1563 = vpop.permute.xlu0 %1562
        %1564 = vrot.lane.b32.xlu0 %v1541, 112
        %v1565 = vpop.permute.xlu0 %1564
        %v1574 = vadd.f32 %v1534, %v1551
        %v1575 = vadd.f32 %v1535, %v1553
        %v1576 = vadd.f32 %v1536, %v1555
        %v1577 = vadd.f32 %v1537, %v1557
        %v1578 = vadd.f32 %v1538, %v1559
        %v1579 = vadd.f32 %v1539, %v1561
        %v1580 = vadd.f32 %v1540, %v1563
        %v1581 = vadd.f32 %v1541, %v1565
        %v1590 = vrot.slane %v1575, 7
        %v1591 = vsel %vm383, %v1590, %v1574
        %v1592 = vrot.slane %v1576, 6
        %v1593 = vsel %vm386, %v1592, %v1591
        %v1594 = vrot.slane %v1577, 5
        %v1595 = vsel %vm389, %v1594, %v1593
        %v1596 = vrot.slane %v1578, 4
        %v1597 = vsel %vm392, %v1596, %v1595
        %v1598 = vrot.slane %v1579, 3
        %v1599 = vsel %vm395, %v1598, %v1597
        %v1600 = vrot.slane %v1580, 2
        %v1601 = vsel %vm398, %v1600, %v1599
        %v1602 = vrot.slane %v1581, 1
        %v1603 = vsel %vm401, %v1602, %v1601
        %v1604 = vsel %vm403, %v1603, 0
        %1606 = vmatprep.subr.mxu0 0.0
        %1607 = vmatpush1.msra.mxu0 0.0
        %1608 = vmatprep.subr.mxu0 0.0
        %1609 = vmatpush1.msra.mxu0 0.0
        %1610 = vmatprep.subr.mxu0 0.0
        %1611 = vmatpush1.msra.mxu0 0.0
        %1612 = vmatprep.subr.mxu0 0.0
        %1613 = vmatpush1.msra.mxu0 0.0
        %1614 = vmatprep.subr.mxu0 0.0
        %1615 = vmatpush1.msra.mxu0 0.0
        %1616 = vmatprep.subr.mxu0 0.0
        %1617 = vmatpush1.msra.mxu0 0.0
        %1618 = vmatprep.subr.mxu0 0.0
        %1619 = vmatpush1.msra.mxu0 0.0
        %1620 = vmatprep.subr.mxu0 0.0
        %1621 = vmatpush1.msra.mxu0 0.0
        %1622 = vmatprep.subr.mxu0 0.0
        %1623 = vmatpush1.msra.mxu0 0.0
        %1624 = vmatprep.subr.mxu0 0.0
        %1625 = vmatpush1.msra.mxu0 0.0
        %1626 = vmatprep.subr.mxu0 0.0
        %1627 = vmatpush1.msra.mxu0 0.0
        %1628 = vmatprep.subr.mxu0 0.0
        %1629 = vmatpush1.msra.mxu0 0.0
        %1630 = vmatprep.subr.mxu0 0.0
        %1631 = vmatpush1.msra.mxu0 0.0
        %1632 = vmatprep.subr.mxu0 0.0
        %1633 = vmatpush1.msra.mxu0 0.0
        %1634 = vmatprep.subr.mxu0 0.0
        %1635 = vmatpush1.msra.mxu0 %v263
        %1636 = vmatprep.subr.mxu0 0.0
        %1637 = vmatpush1.msra.mxu0 %v262
        %1638 = vmatprep.subr.mxu0 0.0
        %1639 = vmatpush2.msra.mxu0 0.0
        %1640 = vmatprep.subr.mxu0 0.0
        %1641 = vmatpush2.msra.mxu0 0.0
        %1642 = vmatprep.subr.mxu0 0.0
        %1643 = vmatpush2.msra.mxu0 0.0
        %1644 = vmatprep.subr.mxu0 0.0
        %1645 = vmatpush2.msra.mxu0 0.0
        %1646 = vmatprep.subr.mxu0 0.0
        %1647 = vmatpush2.msra.mxu0 0.0
        %1648 = vmatprep.subr.mxu0 0.0
        %1649 = vmatpush2.msra.mxu0 0.0
        %1650 = vmatprep.subr.mxu0 0.0
        %1651 = vmatpush2.msra.mxu0 0.0
        %1652 = vmatprep.subr.mxu0 0.0
        %1653 = vmatpush2.msra.mxu0 0.0
        %1654 = vmatprep.subr.mxu0 0.0
        %1655 = vmatpush2.msra.mxu0 0.0
        %1656 = vmatprep.subr.mxu0 0.0
        %1657 = vmatpush2.msra.mxu0 0.0
        %1658 = vmatprep.subr.mxu0 0.0
        %1659 = vmatpush2.msra.mxu0 0.0
        %1660 = vmatprep.subr.mxu0 0.0
        %1661 = vmatpush2.msra.mxu0 0.0
        %1662 = vmatprep.subr.mxu0 0.0
        %1663 = vmatpush2.msra.mxu0 0.0
        %1664 = vmatprep.subr.mxu0 0.0
        %1665 = vmatpush2.msra.mxu0 0.0
        %1666 = vmatprep.subr.mxu0 0.0
        %1667 = vmatpush2.msra.mxu0 0.0
        %1668 = vmatprep.subr.mxu0 0.0
        %1669 = vmatpush2.msra.mxu0 0.0
        %1670 = vmatprep.mubr.f32.mxu0 0.0
        %1671 = vmatmul.mubr.f32.gmra.mxu0 %v1604
        %v1672 = vpop.f32.mrf.mxu0
        %v1673 = vadd.f32 0.0, %v1672
        %v1674 = vpop.f32.mrf.mxu0
        %1675 = vdwg.mxu0
        %1677 = vrot.lane.b32.xlu0 %v1673, 56
        %v1678 = vpop.permute.xlu0 %1677
        %vm1680 = vcmask 523712
        %1681 = vst.msk [vmem:[#allocation2] sm:$0xff] %vm1680, %v1678
        %v1682 = vld [vmem:[%s3] sm:$0xf]
        %v1683 = vld [vmem:[#allocation2] sm:$0xff]
        %v1685 = vsel %vm476, %v1682, 0
        %1687 = vmatprep.subr.mxu0 0.0
        %1688 = vmatpush1.msra.mxu0 0.0
        %1689 = vmatprep.subr.mxu0 0.0
        %1690 = vmatpush1.msra.mxu0 0.0
        %1691 = vmatprep.subr.mxu0 0.0
        %1692 = vmatpush1.msra.mxu0 0.0
        %1693 = vmatprep.subr.mxu0 0.0
        %1694 = vmatpush1.msra.mxu0 0.0
        %1695 = vmatprep.subr.mxu0 0.0
        %1696 = vmatpush1.msra.mxu0 0.0
        %1697 = vmatprep.subr.mxu0 0.0
        %1698 = vmatpush1.msra.mxu0 0.0
        %1699 = vmatprep.subr.mxu0 0.0
        %1700 = vmatpush1.msra.mxu0 0.0
        %1701 = vmatprep.subr.mxu0 0.0
        %1702 = vmatpush1.msra.mxu0 0.0
        %1703 = vmatprep.subr.mxu0 0.0
        %1704 = vmatpush1.msra.mxu0 0.0
        %1705 = vmatprep.subr.mxu0 0.0
        %1706 = vmatpush1.msra.mxu0 0.0
        %1707 = vmatprep.subr.mxu0 0.0
        %1708 = vmatpush1.msra.mxu0 0.0
        %1709 = vmatprep.subr.mxu0 0.0
        %1710 = vmatpush1.msra.mxu0 0.0
        %1711 = vmatprep.subr.mxu0 0.0
        %1712 = vmatpush1.msra.mxu0 0.0
        %1713 = vmatprep.subr.mxu0 0.0
        %1714 = vmatpush1.msra.mxu0 0.0
        %1715 = vmatprep.subr.mxu0 0.0
        %1716 = vmatpush1.msra.mxu0 0.0
        %1717 = vmatprep.subr.mxu0 0.0
        %1718 = vmatpush1.msra.mxu0 %v1683
        %1719 = vmatprep.subr.mxu0 0.0
        %1720 = vmatpush2.msra.mxu0 0.0
        %1721 = vmatprep.subr.mxu0 0.0
        %1722 = vmatpush2.msra.mxu0 0.0
        %1723 = vmatprep.subr.mxu0 0.0
        %1724 = vmatpush2.msra.mxu0 0.0
        %1725 = vmatprep.subr.mxu0 0.0
        %1726 = vmatpush2.msra.mxu0 0.0
        %1727 = vmatprep.subr.mxu0 0.0
        %1728 = vmatpush2.msra.mxu0 0.0
        %1729 = vmatprep.subr.mxu0 0.0
        %1730 = vmatpush2.msra.mxu0 0.0
        %1731 = vmatprep.subr.mxu0 0.0
        %1732 = vmatpush2.msra.mxu0 0.0
        %1733 = vmatprep.subr.mxu0 0.0
        %1734 = vmatpush2.msra.mxu0 0.0
        %1735 = vmatprep.subr.mxu0 0.0
        %1736 = vmatpush2.msra.mxu0 0.0
        %1737 = vmatprep.subr.mxu0 0.0
        %1738 = vmatpush2.msra.mxu0 0.0
        %1739 = vmatprep.subr.mxu0 0.0
        %1740 = vmatpush2.msra.mxu0 0.0
        %1741 = vmatprep.subr.mxu0 0.0
        %1742 = vmatpush2.msra.mxu0 0.0
        %1743 = vmatprep.subr.mxu0 0.0
        %1744 = vmatpush2.msra.mxu0 0.0
        %1745 = vmatprep.subr.mxu0 0.0
        %1746 = vmatpush2.msra.mxu0 0.0
        %1747 = vmatprep.subr.mxu0 0.0
        %1748 = vmatpush2.msra.mxu0 0.0
        %1749 = vmatprep.subr.mxu0 0.0
        %1750 = vmatpush2.msra.mxu0 0.0
        %1751 = vmatprep.mubr.f32.mxu0 0.0
        %1752 = vmatmul.mubr.f32.gmra.mxu0 %v1685
        %v1753 = vpop.f32.mrf.mxu0
        %v1754 = vadd.f32 0.0, %v1753
        %v1755 = vpop.f32.mrf.mxu0
        %1756 = vdwg.mxu0
        %vm1757 = vcmask 519168
        %1758 = vst.msk [vmem:[%s259] sm:$0xf] %vm1757, %v1754
        %s1759 = sand.u32 %s156, 1
        %s1760 = scalar_lea.sflag [#allocation5], %s1759
        %s1761 = sand.u32 %s156, 1
        %s1762 = smul.addr %s1761, 4
        %s1763 = scalar_lea.vmem [#allocation6], %s1762
        // Predicated region
        $region45: #{tpu_custom_call.1} parent=39 // pred_check
          %p1764 = pneg %p166
        $region46: #{tpu_custom_call.1} parent=39 // pred_check_branch
          %1766 = sbr.rel (%p1764) target = $region48
        $region47: #{tpu_custom_call.1} parent=39 // pred_region
          %s1768 = ssub.s32 64, 64
          %1769 = vsyncadd %s1760, %s1768
          %s1770 = sadd.s32 %s27, %s26
          %s1771 = smul.addr %s1770, 64
          %s1772 = scalar_lea.hbm %s5, %s1771
          %s1774 = sshll.u32 %s1763, 4
          %s1775 = int_to_ptr.vmem [resolvable:$true] %s1774
          %1777 = dma.vmem_to_hbm [thread:$0]  %s1775, 64, %s1772, %s1760
        $region48: #{tpu_custom_call.1} parent=39 // pred_fallthru
          _
      $region40: #{tpu_custom_call.1} parent=5 // pred_fallthru
        _
      %p1778 = scmp.le.s32.totalorder 2, %s17
      // Predicated region
      $region49: #{tpu_custom_call.1} parent=5 // pred_check
        %p1779 = pneg %p1778
      $region50: #{tpu_custom_call.1} parent=5 // pred_check_branch
        %1781 = sbr.rel (%p1779) target = $region52
      $region51: #{tpu_custom_call.1} parent=5 // pred_region
        %s1782 = ssub.s32 %s17, 2
        // Predicated region
        $region53: #{tpu_custom_call.1} parent=51 // pred_check
          %p1783 = pneg %p172
        $region54: #{tpu_custom_call.1} parent=51 // pred_check_branch
          %1785 = sbr.rel (%p1783) target = $region56
        $region55: #{tpu_custom_call.1} parent=51 // pred_region
          %s1786 = sand.u32 %s157, 1
          %s1787 = scalar_lea.sflag [#allocation5], %s1786
          %s1788 = sand.u32 %s157, 1
          %s1789 = smul.addr %s1788, 4
          %s1790 = scalar_lea.vmem [#allocation6], %s1789
          %1791 = dma.done %s1787, 64
        $region56: #{tpu_custom_call.1} parent=51 // pred_fallthru
          _
      $region52: #{tpu_custom_call.1} parent=5 // pred_fallthru
        _
    $region6: #{tpu_custom_call.1} parent=1 // loop_footer
      %s21 = sadd.s32 1, %s17
    $region7: #{tpu_custom_call.1} parent=1 // loop_footer_branch
      %16 = sbr.rel target = $region3
    $region8: #{tpu_custom_call.1} parent=1 // loop_exit
      _
    %1792 = vsyncpa [#allocation4], 1
    %s1793 = scalar_lea.sflag [#allocation4], 1
    %1794 = vsyncpa %s1793, 1
    %1795 = vsyncpa [#allocation5], 1
    %s1796 = scalar_lea.sflag [#allocation5], 1
    %1797 = vsyncpa %s1796, 1

</llo_original>
